<compile_context>
chip_gen: v6e
topology: v6e:2x2x1
jax: 0.10.0
libtpu: 0.0.40
codegen_flags: <defaults>
</compile_context>

<pallas_src>
import jax
import jax.numpy as jnp
from jax import lax
from jax.experimental import pallas as pl
from jax.experimental.pallas import tpu as pltpu

BN_EPS = 1e-5

# Set to jnp.bfloat16 on v6e / v7x (and optionally v5e) for ~2x MXU throughput
# and halved weight DMA bytes; accumulation stays f32 via
# preferred_element_type, biases / (1+eps) math stay f32.  Keep f32 for tight
# numerical checks against the f32 reference (loosen tolerance if bf16).
MXU_DTYPE = jnp.float32


def _mm(a, b):
    """2D matmul on the MXU with f32 accumulation."""
    return jnp.dot(a.astype(MXU_DTYPE), b.astype(MXU_DTYPE),
                   preferred_element_type=jnp.float32)


# ---------------------------------------------------------------------------
# Fused kernel: all GIN layers + head + decoder for one batch tile.
# ---------------------------------------------------------------------------
def make_fused_kernel(L, BT, N, hidden, latent):
    T = BT * N

    def kernel(eps_ref,                                   # SMEM (L,)  f32
               ops_ref, adj_ref, wstk_ref, bstk_ref,      # inputs
               wml_ref, bml_ref, wdec_ref, bdec_ref,
               slab_ref, adjr_ref):                       # outputs
        adj_bd = adj_ref[...]                             # (T, T) block-diag adjacency
        x2 = ops_ref[...]                                 # (T, Din) f32

        for l in range(L):
            d = x2.shape[1]
            # GIN aggregation: adj @ x + (1 + eps_l) * x   (eps scalar from SMEM, f32)
            agg = _mm(adj_bd, x2) + (1.0 + eps_ref[l]) * x2
            # MLP hidden layer (+ folded BN) + relu
            w1 = wstk_ref[2 * l][:d, :]                   # (d, H)
            h = jnp.maximum(_mm(agg, w1) + bstk_ref[2 * l], 0.0)
            # MLP output layer (+ folded outer BN) + relu
            w2 = wstk_ref[2 * l + 1][:hidden, :]          # (H, H)
            x2 = jnp.maximum(_mm(h, w2) + bstk_ref[2 * l + 1], 0.0)

        # fc1 / fc2 fused into one GEMM -> [mu || logvar]
        mulv = _mm(x2, wml_ref[...]) + bml_ref[...]       # (T, 2*latent) f32

        # Decoder (eval mode: z = mu, dropout = identity)
        z2 = mulv[:, :latent]                             # (T, latent)
        opsr = jax.nn.sigmoid(_mm(z2, wdec_ref[...]) + bdec_ref[...])   # (T, Din)

        # One lane-dense output slab: [mu || logvar || ops_recon]
        slab_ref[...] = jnp.concatenate([mulv, opsr], axis=1)

        # Adjacency reconstruction: per-batch z z^T within the tile.
        z3 = z2.reshape(BT, N, latent)
        adjl = jnp.einsum('bnd,bmd->bnm', z3, z3,
                          preferred_element_type=jnp.float32)
        adjr_ref[...] = jax.nn.sigmoid(adjl).reshape(T, N)

    return kernel


# ---------------------------------------------------------------------------
# One-time parameter preparation: fold eval-mode BN into the Linear weights,
# pre-transpose, stack all GIN weights/biases, concatenate fc1/fc2, pre-cast.
# ---------------------------------------------------------------------------
def prepare_params(params, mxu_dtype=MXU_DTYPE):
    gin = params["gin"]
    L = len(gin)
    hidden = gin[0]["w1"].shape[0]
    din0 = gin[0]["w1"].shape[1]
    M = max(hidden, din0)        # padded row-dim of the stacked GIN weights

    w_list, b_list = [], []
    for p in gin:
        s1 = p["g1"] * lax.rsqrt(p["rv1"] + BN_EPS)       # BN inside MLP
        w1t = (p["w1"] * s1[:, None]).T                   # (din_l, H)
        b1 = ((p["b1"] - p["rm1"]) * s1 + p["be1"]).reshape(1, -1)
        so = p["go"] * lax.rsqrt(p["rvo"] + BN_EPS)       # outer BN
        w2t = (p["w2"] * so[:, None]).T                   # (H, H)
        b2 = ((p["b2"] - p["rmo"]) * so + p["beo"]).reshape(1, -1)
        w_list.append(jnp.zeros((M, hidden), jnp.float32).at[:w1t.shape[0]].set(w1t))
        w_list.append(jnp.zeros((M, hidden), jnp.float32).at[:hidden].set(w2t))
        b_list += [b1, b2]

    wstk = jnp.stack(w_list).astype(mxu_dtype)            # (2L, M, H)
    bstk = jnp.stack(b_list)                              # (2L, 1, H) f32
    wml = jnp.concatenate([params["wmu"].T, params["wlv"].T],
                          axis=1).astype(mxu_dtype)       # (H, 2*latent)
    bml = jnp.concatenate([params["bmu"], params["blv"]]).reshape(1, -1)
    wdec = params["wdec"].T.astype(mxu_dtype)             # (latent, Din)
    bdec = params["bdec"].reshape(1, -1)
    return dict(eps=params["eps"].astype(jnp.float32),
                wstk=wstk, bstk=bstk, wml=wml, bml=bml, wdec=wdec, bdec=bdec,
                num_layers=L, hidden=hidden, latent=params["wmu"].shape[0])


# ---------------------------------------------------------------------------
# Full model forward (single fused Pallas call, grid over batch tiles).
# ---------------------------------------------------------------------------
def model_forward(prepped, ops, adj, batch_tile=1):
    B, N, Din = ops.shape
    L = prepped["num_layers"]
    hidden = prepped["hidden"]
    latent = prepped["latent"]
    BT = batch_tile
    assert B % BT == 0, "batch must be divisible by batch_tile"
    T = BT * N
    n_tiles = B // BT
    slab_w = 2 * latent + Din

    ops2 = ops.astype(jnp.float32).reshape(B * N, Din)

    # Block-diagonal per-tile adjacency, stacked as (B*N, T): rows
    # [t*T:(t+1)*T] hold tile t's (T, T) block-diag.  Adjacency is passed ONCE;
    # (1 + eps_l) is applied in-kernel (f32), not folded into these entries.
    adjr4 = adj.astype(jnp.float32).reshape(n_tiles, BT, N, N)
    eye_bt = jnp.eye(BT, dtype=jnp.float32)
    adj_bd = jnp.einsum('tjnm,jk->tjnkm', adjr4, eye_bt)
    adj_bd = adj_bd.reshape(n_tiles * T, T).astype(MXU_DTYPE)   # 0/1: exact in bf16

    grid_spec = pltpu.PrefetchScalarGridSpec(
        num_scalar_prefetch=1,                  # eps -> SMEM scalars
        grid=(n_tiles,),
        in_specs=[
            pl.BlockSpec((T, Din), lambda t, eps: (t, 0)),               # ops tile
            pl.BlockSpec((T, T), lambda t, eps: (t, 0)),                 # adj tile
            pl.BlockSpec(prepped["wstk"].shape, lambda t, eps: (0, 0, 0)),
            pl.BlockSpec(prepped["bstk"].shape, lambda t, eps: (0, 0, 0)),
            pl.BlockSpec(prepped["wml"].shape, lambda t, eps: (0, 0)),
            pl.BlockSpec(prepped["bml"].shape, lambda t, eps: (0, 0)),
            pl.BlockSpec(prepped["wdec"].shape, lambda t, eps: (0, 0)),
            pl.BlockSpec(prepped["bdec"].shape, lambda t, eps: (0, 0)),
        ],
        out_specs=[
            pl.BlockSpec((T, slab_w), lambda t, eps: (t, 0)),            # [mu|lv|ops]
            pl.BlockSpec((T, N), lambda t, eps: (t, 0)),                 # adj recon
        ],
    )
    out_shapes = (
        jax.ShapeDtypeStruct((B * N, slab_w), jnp.float32),
        jax.ShapeDtypeStruct((B * N, N), jnp.float32),
    )
    # NOTE: vmem limit kept well below v7x's 64 MiB per-TC budget.
    slab, adjr = pl.pallas_call(
        make_fused_kernel(L, BT, N, hidden, latent),
        out_shape=out_shapes,
        grid_spec=grid_spec,
        compiler_params=pltpu.CompilerParams(
            dimension_semantics=("parallel",),
            vmem_limit_bytes=32 * 1024 * 1024),
    )(prepped["eps"], ops2, adj_bd,
      prepped["wstk"], prepped["bstk"],
      prepped["wml"], prepped["bml"], prepped["wdec"], prepped["bdec"])

    slab = slab.reshape(B, N, slab_w)
    mu = slab[..., :latent]
    logvar = slab[..., latent:2 * latent]
    ops_recon = slab[..., 2 * latent:]
    adj_recon = adjr.reshape(B, N, N)
    return ops_recon, adj_recon, mu, logvar


# ---------------------------------------------------------------------------
# Pure-JAX reference (unfolded params) for correctness check.
# ---------------------------------------------------------------------------
def bn_eval(x, g, b, rm, rv):
    return (x - rm) / jnp.sqrt(rv + BN_EPS) * g + b


def ref_forward(params, ops, adj):
    x = ops.astype(jnp.float32)
    adj = adj.astype(jnp.float32)
    for l, p in enumerate(params["gin"]):
        neighbor = jnp.einsum("bnm,bmd->bnd", adj, x)
        agg = (1.0 + params["eps"][l]) * x + neighbor
        h = jnp.maximum(bn_eval(agg @ p["w1"].T + p["b1"],
                                p["g1"], p["be1"], p["rm1"], p["rv1"]), 0.0)
        m = h @ p["w2"].T + p["b2"]
        x = jnp.maximum(bn_eval(m, p["go"], p["beo"], p["rmo"], p["rvo"]), 0.0)
    mu = x @ params["wmu"].T + params["bmu"]
    logvar = x @ params["wlv"].T + params["blv"]
    z = mu
    ops_recon = jax.nn.sigmoid(z @ params["wdec"].T + params["bdec"])
    adj_recon = jax.nn.sigmoid(jnp.einsum("bnd,bmd->bnm", z, z))
    return ops_recon, adj_recon, mu, logvar


# ---------------------------------------------------------------------------
# Deterministic parameter init (shapes follow the PyTorch __init__).
# ---------------------------------------------------------------------------
def init_params(key, input_dim, hidden_dim, latent_dim, num_hops):
    num_gin_layers = num_hops - 1
    keys = iter(jax.random.split(key, 8 * num_gin_layers + 16))

    def nrm(shape, scale=0.1):
        return scale * jax.random.normal(next(keys), shape, dtype=jnp.float32)

    gin = []
    for l in range(num_gin_layers):
        din = input_dim if l == 0 else hidden_dim
        gin.append(dict(
            w1=nrm((hidden_dim, din)), b1=nrm((hidden_dim,)),
            g1=1.0 + nrm((hidden_dim,)), be1=nrm((hidden_dim,)),
            rm1=nrm((hidden_dim,)), rv1=1.0 + jnp.abs(nrm((hidden_dim,))),
            w2=nrm((hidden_dim, hidden_dim)), b2=nrm((hidden_dim,)),
            go=1.0 + nrm((hidden_dim,)), beo=nrm((hidden_dim,)),
            rmo=nrm((hidden_dim,)), rvo=1.0 + jnp.abs(nrm((hidden_dim,))),
        ))
    return dict(
        eps=nrm((num_gin_layers,)),
        gin=gin,
        wmu=nrm((latent_dim, hidden_dim)), bmu=nrm((latent_dim,)),
        wlv=nrm((latent_dim, hidden_dim)), blv=nrm((latent_dim,)),
        wdec=nrm((input_dim, latent_dim)), bdec=nrm((input_dim,)),
    )


if __name__ == "__main__":
    B, N = 2, 8
    INPUT_DIM, HIDDEN_DIM, LATENT_DIM = 16, 32, 16
    NUM_HOPS = 3                      # -> 2 GIN layers; num_mlp_layers = 2

    key = jax.random.PRNGKey(0)
    k_ops, k_adj, k_par = jax.random.split(key, 3)
    ops = jax.random.normal(k_ops, (B, N, INPUT_DIM), dtype=jnp.float32)
    adj = (jax.random.uniform(k_adj, (B, N, N)) < 0.3).astype(jnp.float32)

    params = init_params(k_par, INPUT_DIM, HIDDEN_DIM, LATENT_DIM, NUM_HOPS)
    prepped = prepare_params(params)

    outs = model_forward(prepped, ops, adj, batch_tile=1)
    outs = jax.block_until_ready(outs)

    refs = ref_forward(params, ops, adj)
    tol = 1e-4 if MXU_DTYPE == jnp.float32 else 3e-2
    for o, r in zip(outs, refs):
        assert o.shape == r.shape, (o.shape, r.shape)
        assert jnp.allclose(o, r, atol=tol, rtol=tol), float(jnp.max(jnp.abs(o - r)))

    print("KERNEL_OK")
</pallas_src>

<mosaic_0001>
module attributes {stable_mosaic.version = 11 : i64} {
  func.func @kernel(%arg0: i32, %arg1: memref<2xf32, #tpu.memory_space<smem>>, %arg2: memref<8x16xf32, #tpu.memory_space<vmem>>, %arg3: memref<8x8xf32, #tpu.memory_space<vmem>>, %arg4: memref<4x32x32xf32, #tpu.memory_space<vmem>>, %arg5: memref<4x1x32xf32, #tpu.memory_space<vmem>>, %arg6: memref<32x32xf32, #tpu.memory_space<vmem>>, %arg7: memref<1x32xf32, #tpu.memory_space<vmem>>, %arg8: memref<16x16xf32, #tpu.memory_space<vmem>>, %arg9: memref<1x16xf32, #tpu.memory_space<vmem>>, %arg10: memref<8x48xf32, #tpu.memory_space<vmem>>, %arg11: memref<8x8xf32, #tpu.memory_space<vmem>>) attributes {dimension_semantics = [#tpu.dimension_semantics<parallel>], iteration_bounds = array<i64: 2>, scalar_prefetch = 1 : i64, scratch_operands = 0 : i64, tpu.core_type = #tpu.core_type<tc>, window_params = [{transform_indices = @transform_0, window_bounds = array<i64: 8, 16>}, {transform_indices = @transform_1, window_bounds = array<i64: 8, 8>}, {pipeline_mode = #tpu.pipeline_mode<synchronous>, transform_indices = @transform_2, window_bounds = array<i64: 4, 32, 32>}, {pipeline_mode = #tpu.pipeline_mode<synchronous>, transform_indices = @transform_3, window_bounds = array<i64: 4, 1, 32>}, {pipeline_mode = #tpu.pipeline_mode<synchronous>, transform_indices = @transform_4, window_bounds = array<i64: 32, 32>}, {pipeline_mode = #tpu.pipeline_mode<synchronous>, transform_indices = @transform_5, window_bounds = array<i64: 1, 32>}, {pipeline_mode = #tpu.pipeline_mode<synchronous>, transform_indices = @transform_6, window_bounds = array<i64: 16, 16>}, {pipeline_mode = #tpu.pipeline_mode<synchronous>, transform_indices = @transform_7, window_bounds = array<i64: 1, 16>}, {transform_indices = @transform_8, window_bounds = array<i64: 8, 48>}, {transform_indices = @transform_9, window_bounds = array<i64: 8, 8>}]} {
    %c0 = arith.constant 0 : index
    %c0_0 = arith.constant 0 : index
    %0 = vector.load %arg3[%c0, %c0_0] : memref<8x8xf32, #tpu.memory_space<vmem>>, vector<8x8xf32>
    %c0_1 = arith.constant 0 : index
    %c0_2 = arith.constant 0 : index
    %1 = vector.load %arg2[%c0_1, %c0_2] : memref<8x16xf32, #tpu.memory_space<vmem>>, vector<8x16xf32>
    %cst = arith.constant dense<0.000000e+00> : vector<8x16xf32>
    %2 = tpu.matmul %0, %1, %cst {dimension_numbers = #tpu.dot_dimension_numbers<[1], [0], [0], [1], [0, 0, 1, 1], [], []>} : vector<8x8xf32>, vector<8x16xf32>, vector<8x16xf32> -> vector<8x16xf32>
    %c0_3 = arith.constant 0 : index
    %3 = memref.load %arg1[%c0_3] : memref<2xf32, #tpu.memory_space<smem>>
    %cst_4 = arith.constant 1.000000e+00 : f32
    %4 = arith.addf %cst_4, %3 : f32
    %5 = vector.broadcast %4 : f32 to vector<8x16xf32>
    %6 = arith.mulf %5, %1 : vector<8x16xf32>
    %7 = arith.addf %2, %6 : vector<8x16xf32>
    %c0_5 = arith.constant 0 : index
    %c0_6 = arith.constant 0 : index
    %c0_7 = arith.constant 0 : index
    %8 = vector.load %arg4[%c0_5, %c0_6, %c0_7] : memref<4x32x32xf32, #tpu.memory_space<vmem>>, vector<1x32x32xf32>
    %9 = vector.shape_cast %8 : vector<1x32x32xf32> to vector<32x32xf32>
    %10 = vector.extract_strided_slice %9 {offsets = [0, 0], sizes = [16, 32], strides = [1, 1]} : vector<32x32xf32> to vector<16x32xf32>
    %cst_8 = arith.constant dense<0.000000e+00> : vector<8x32xf32>
    %11 = tpu.matmul %7, %10, %cst_8 {dimension_numbers = #tpu.dot_dimension_numbers<[1], [0], [0], [1], [0, 0, 1, 1], [], []>} : vector<8x16xf32>, vector<16x32xf32>, vector<8x32xf32> -> vector<8x32xf32>
    %c0_9 = arith.constant 0 : index
    %c0_10 = arith.constant 0 : index
    %c0_11 = arith.constant 0 : index
    %12 = vector.load %arg5[%c0_9, %c0_10, %c0_11] : memref<4x1x32xf32, #tpu.memory_space<vmem>>, vector<1x1x32xf32>
    %13 = vector.shape_cast %12 : vector<1x1x32xf32> to vector<1x32xf32>
    %14 = vector.broadcast %13 : vector<1x32xf32> to vector<8x32xf32>
    %15 = arith.addf %11, %14 : vector<8x32xf32>
    %cst_12 = arith.constant 0.000000e+00 : f32
    %16 = vector.broadcast %cst_12 : f32 to vector<8x32xf32>
    %17 = arith.maximumf %15, %16 : vector<8x32xf32>
    %c1 = arith.constant 1 : index
    %c0_13 = arith.constant 0 : index
    %c0_14 = arith.constant 0 : index
    %18 = vector.load %arg4[%c1, %c0_13, %c0_14] : memref<4x32x32xf32, #tpu.memory_space<vmem>>, vector<1x32x32xf32>
    %19 = vector.shape_cast %18 : vector<1x32x32xf32> to vector<32x32xf32>
    %cst_15 = arith.constant dense<0.000000e+00> : vector<8x32xf32>
    %20 = tpu.matmul %17, %19, %cst_15 {dimension_numbers = #tpu.dot_dimension_numbers<[1], [0], [0], [1], [0, 0, 1, 1], [], []>} : vector<8x32xf32>, vector<32x32xf32>, vector<8x32xf32> -> vector<8x32xf32>
    %c1_16 = arith.constant 1 : index
    %c0_17 = arith.constant 0 : index
    %c0_18 = arith.constant 0 : index
    %21 = vector.load %arg5[%c1_16, %c0_17, %c0_18] : memref<4x1x32xf32, #tpu.memory_space<vmem>>, vector<1x1x32xf32>
    %22 = vector.shape_cast %21 : vector<1x1x32xf32> to vector<1x32xf32>
    %23 = vector.broadcast %22 : vector<1x32xf32> to vector<8x32xf32>
    %24 = arith.addf %20, %23 : vector<8x32xf32>
    %cst_19 = arith.constant 0.000000e+00 : f32
    %25 = vector.broadcast %cst_19 : f32 to vector<8x32xf32>
    %26 = arith.maximumf %24, %25 : vector<8x32xf32>
    %cst_20 = arith.constant dense<0.000000e+00> : vector<8x32xf32>
    %27 = tpu.matmul %0, %26, %cst_20 {dimension_numbers = #tpu.dot_dimension_numbers<[1], [0], [0], [1], [0, 0, 1, 1], [], []>} : vector<8x8xf32>, vector<8x32xf32>, vector<8x32xf32> -> vector<8x32xf32>
    %c1_21 = arith.constant 1 : index
    %28 = memref.load %arg1[%c1_21] : memref<2xf32, #tpu.memory_space<smem>>
    %cst_22 = arith.constant 1.000000e+00 : f32
    %29 = arith.addf %cst_22, %28 : f32
    %30 = vector.broadcast %29 : f32 to vector<8x32xf32>
    %31 = arith.mulf %30, %26 : vector<8x32xf32>
    %32 = arith.addf %27, %31 : vector<8x32xf32>
    %c2 = arith.constant 2 : index
    %c0_23 = arith.constant 0 : index
    %c0_24 = arith.constant 0 : index
    %33 = vector.load %arg4[%c2, %c0_23, %c0_24] : memref<4x32x32xf32, #tpu.memory_space<vmem>>, vector<1x32x32xf32>
    %34 = vector.shape_cast %33 : vector<1x32x32xf32> to vector<32x32xf32>
    %cst_25 = arith.constant dense<0.000000e+00> : vector<8x32xf32>
    %35 = tpu.matmul %32, %34, %cst_25 {dimension_numbers = #tpu.dot_dimension_numbers<[1], [0], [0], [1], [0, 0, 1, 1], [], []>} : vector<8x32xf32>, vector<32x32xf32>, vector<8x32xf32> -> vector<8x32xf32>
    %c2_26 = arith.constant 2 : index
    %c0_27 = arith.constant 0 : index
    %c0_28 = arith.constant 0 : index
    %36 = vector.load %arg5[%c2_26, %c0_27, %c0_28] : memref<4x1x32xf32, #tpu.memory_space<vmem>>, vector<1x1x32xf32>
    %37 = vector.shape_cast %36 : vector<1x1x32xf32> to vector<1x32xf32>
    %38 = vector.broadcast %37 : vector<1x32xf32> to vector<8x32xf32>
    %39 = arith.addf %35, %38 : vector<8x32xf32>
    %cst_29 = arith.constant 0.000000e+00 : f32
    %40 = vector.broadcast %cst_29 : f32 to vector<8x32xf32>
    %41 = arith.maximumf %39, %40 : vector<8x32xf32>
    %c3 = arith.constant 3 : index
    %c0_30 = arith.constant 0 : index
    %c0_31 = arith.constant 0 : index
    %42 = vector.load %arg4[%c3, %c0_30, %c0_31] : memref<4x32x32xf32, #tpu.memory_space<vmem>>, vector<1x32x32xf32>
    %43 = vector.shape_cast %42 : vector<1x32x32xf32> to vector<32x32xf32>
    %cst_32 = arith.constant dense<0.000000e+00> : vector<8x32xf32>
    %44 = tpu.matmul %41, %43, %cst_32 {dimension_numbers = #tpu.dot_dimension_numbers<[1], [0], [0], [1], [0, 0, 1, 1], [], []>} : vector<8x32xf32>, vector<32x32xf32>, vector<8x32xf32> -> vector<8x32xf32>
    %c3_33 = arith.constant 3 : index
    %c0_34 = arith.constant 0 : index
    %c0_35 = arith.constant 0 : index
    %45 = vector.load %arg5[%c3_33, %c0_34, %c0_35] : memref<4x1x32xf32, #tpu.memory_space<vmem>>, vector<1x1x32xf32>
    %46 = vector.shape_cast %45 : vector<1x1x32xf32> to vector<1x32xf32>
    %47 = vector.broadcast %46 : vector<1x32xf32> to vector<8x32xf32>
    %48 = arith.addf %44, %47 : vector<8x32xf32>
    %cst_36 = arith.constant 0.000000e+00 : f32
    %49 = vector.broadcast %cst_36 : f32 to vector<8x32xf32>
    %50 = arith.maximumf %48, %49 : vector<8x32xf32>
    %c0_37 = arith.constant 0 : index
    %c0_38 = arith.constant 0 : index
    %51 = vector.load %arg6[%c0_37, %c0_38] : memref<32x32xf32, #tpu.memory_space<vmem>>, vector<32x32xf32>
    %cst_39 = arith.constant dense<0.000000e+00> : vector<8x32xf32>
    %52 = tpu.matmul %50, %51, %cst_39 {dimension_numbers = #tpu.dot_dimension_numbers<[1], [0], [0], [1], [0, 0, 1, 1], [], []>} : vector<8x32xf32>, vector<32x32xf32>, vector<8x32xf32> -> vector<8x32xf32>
    %c0_40 = arith.constant 0 : index
    %c0_41 = arith.constant 0 : index
    %53 = vector.load %arg7[%c0_40, %c0_41] : memref<1x32xf32, #tpu.memory_space<vmem>>, vector<1x32xf32>
    %54 = vector.broadcast %53 : vector<1x32xf32> to vector<8x32xf32>
    %55 = arith.addf %52, %54 : vector<8x32xf32>
    %56 = vector.extract_strided_slice %55 {offsets = [0, 0], sizes = [8, 16], strides = [1, 1]} : vector<8x32xf32> to vector<8x16xf32>
    %c0_42 = arith.constant 0 : index
    %c0_43 = arith.constant 0 : index
    %57 = vector.load %arg8[%c0_42, %c0_43] : memref<16x16xf32, #tpu.memory_space<vmem>>, vector<16x16xf32>
    %cst_44 = arith.constant dense<0.000000e+00> : vector<8x16xf32>
    %58 = tpu.matmul %56, %57, %cst_44 {dimension_numbers = #tpu.dot_dimension_numbers<[1], [0], [0], [1], [0, 0, 1, 1], [], []>} : vector<8x16xf32>, vector<16x16xf32>, vector<8x16xf32> -> vector<8x16xf32>
    %c0_45 = arith.constant 0 : index
    %c0_46 = arith.constant 0 : index
    %59 = vector.load %arg9[%c0_45, %c0_46] : memref<1x16xf32, #tpu.memory_space<vmem>>, vector<1x16xf32>
    %60 = vector.broadcast %59 : vector<1x16xf32> to vector<8x16xf32>
    %61 = arith.addf %58, %60 : vector<8x16xf32>
    %62 = arith.negf %61 : vector<8x16xf32>
    %63 = math.exp %62 : vector<8x16xf32>
    %cst_47 = arith.constant 1.000000e+00 : f32
    %64 = vector.broadcast %cst_47 : f32 to vector<8x16xf32>
    %65 = arith.addf %64, %63 : vector<8x16xf32>
    %66 = arith.divf %64, %65 : vector<8x16xf32>
    %67 = tpu.concatenate %55, %66 in 1 : vector<8x32xf32>, vector<8x16xf32> -> vector<8x48xf32>
    %c0_48 = arith.constant 0 : index
    %c0_49 = arith.constant 0 : index
    %68 = vector.load %arg10[%c0_48, %c0_49] : memref<8x48xf32, #tpu.memory_space<vmem>>, vector<8x48xf32>
    tpu.vector_store %arg10[%c0_48, %c0_49], %67 {strides = array<i32>} : memref<8x48xf32, #tpu.memory_space<vmem>>, vector<8x48xf32>,
    %69 = vector.shape_cast %56 : vector<8x16xf32> to vector<1x8x16xf32>
    "tpu.trace_start"() <{level = 10 : i32, message = "bnd,bmd->bnm"}> : () -> ()
    %cst_50 = arith.constant dense<0.000000e+00> : vector<1x8x8xf32>
    %70 = tpu.matmul %69, %69, %cst_50 {dimension_numbers = #tpu.dot_dimension_numbers<[2], [2], [1], [1], [0, 0, 0, 1, 1, 1], [0], [0]>} : vector<1x8x16xf32>, vector<1x8x16xf32>, vector<1x8x8xf32> -> vector<1x8x8xf32>
    "tpu.trace_stop"() : () -> ()
    %71 = arith.negf %70 : vector<1x8x8xf32>
    %72 = math.exp %71 : vector<1x8x8xf32>
    %cst_51 = arith.constant 1.000000e+00 : f32
    %73 = vector.broadcast %cst_51 : f32 to vector<1x8x8xf32>
    %74 = arith.addf %73, %72 : vector<1x8x8xf32>
    %75 = arith.divf %73, %74 : vector<1x8x8xf32>
    %76 = vector.shape_cast %75 : vector<1x8x8xf32> to vector<8x8xf32>
    %c0_52 = arith.constant 0 : index
    %c0_53 = arith.constant 0 : index
    %77 = vector.load %arg11[%c0_52, %c0_53] : memref<8x8xf32, #tpu.memory_space<vmem>>, vector<8x8xf32>
    tpu.vector_store %arg11[%c0_52, %c0_53], %76 {strides = array<i32>} : memref<8x8xf32, #tpu.memory_space<vmem>>, vector<8x8xf32>,
    return
  }
  func.func @transform_0(%arg0: i32, %arg1: memref<2xf32, #tpu.memory_space<smem>>) -> (i32, i32) {
    %c0_i32 = arith.constant 0 : i32
    %c0_i32_0 = arith.constant 0 : i32
    return %arg0, %c0_i32 : i32, i32
  }
  func.func @transform_1(%arg0: i32, %arg1: memref<2xf32, #tpu.memory_space<smem>>) -> (i32, i32) {
    %c0_i32 = arith.constant 0 : i32
    %c0_i32_0 = arith.constant 0 : i32
    return %arg0, %c0_i32 : i32, i32
  }
  func.func @transform_2(%arg0: i32, %arg1: memref<2xf32, #tpu.memory_space<smem>>) -> (i32, i32, i32) {
    %c0_i32 = arith.constant 0 : i32
    %c0_i32_0 = arith.constant 0 : i32
    %c0_i32_1 = arith.constant 0 : i32
    %c0_i32_2 = arith.constant 0 : i32
    return %c0_i32, %c0_i32_0, %c0_i32_1 : i32, i32, i32
  }
  func.func @transform_3(%arg0: i32, %arg1: memref<2xf32, #tpu.memory_space<smem>>) -> (i32, i32, i32) {
    %c0_i32 = arith.constant 0 : i32
    %c0_i32_0 = arith.constant 0 : i32
    %c0_i32_1 = arith.constant 0 : i32
    %c0_i32_2 = arith.constant 0 : i32
    return %c0_i32, %c0_i32_0, %c0_i32_1 : i32, i32, i32
  }
  func.func @transform_4(%arg0: i32, %arg1: memref<2xf32, #tpu.memory_space<smem>>) -> (i32, i32) {
    %c0_i32 = arith.constant 0 : i32
    %c0_i32_0 = arith.constant 0 : i32
    %c0_i32_1 = arith.constant 0 : i32
    return %c0_i32, %c0_i32_0 : i32, i32
  }
  func.func @transform_5(%arg0: i32, %arg1: memref<2xf32, #tpu.memory_space<smem>>) -> (i32, i32) {
    %c0_i32 = arith.constant 0 : i32
    %c0_i32_0 = arith.constant 0 : i32
    %c0_i32_1 = arith.constant 0 : i32
    return %c0_i32, %c0_i32_0 : i32, i32
  }
  func.func @transform_6(%arg0: i32, %arg1: memref<2xf32, #tpu.memory_space<smem>>) -> (i32, i32) {
    %c0_i32 = arith.constant 0 : i32
    %c0_i32_0 = arith.constant 0 : i32
    %c0_i32_1 = arith.constant 0 : i32
    return %c0_i32, %c0_i32_0 : i32, i32
  }
  func.func @transform_7(%arg0: i32, %arg1: memref<2xf32, #tpu.memory_space<smem>>) -> (i32, i32) {
    %c0_i32 = arith.constant 0 : i32
    %c0_i32_0 = arith.constant 0 : i32
    %c0_i32_1 = arith.constant 0 : i32
    return %c0_i32, %c0_i32_0 : i32, i32
  }
  func.func @transform_8(%arg0: i32, %arg1: memref<2xf32, #tpu.memory_space<smem>>) -> (i32, i32) {
    %c0_i32 = arith.constant 0 : i32
    %c0_i32_0 = arith.constant 0 : i32
    return %arg0, %c0_i32 : i32, i32
  }
  func.func @transform_9(%arg0: i32, %arg1: memref<2xf32, #tpu.memory_space<smem>>) -> (i32, i32) {
    %c0_i32 = arith.constant 0 : i32
    %c0_i32_0 = arith.constant 0 : i32
    return %arg0, %c0_i32 : i32, i32
  }
}

</mosaic_0001>

<llo_original>
// kernel: tpu_custom_call.1
$region0: #{tpu_custom_call.1}
  #allocation0 [shape = 'u32[]', space=smem, size = 0x4, offset = 0x4, fixed_abs, tag = 'smem constant byte address 0x4 - core index']
  #allocation1 [shape = 'u32[144,128]{1,0:T(1,128)}', space=vmem, size = 0x12000, scoped, tag = 'internal scratch']
  #allocation2 [shape = 's32[1]{0}', space=sflag, size = 0x4, scoped, tag = 'scoped memory for tpu_custom_call.1']
  #allocation3 [shape = 'u8[512]{0}', space=smem, size = 0x200, scoped, tag = 'prefetched SMEM operand 0']
  %s0 = inlined_call_operand.vmem [shape: f32[2], index: 0, kind: input, shape index: {}]
  %s1 = inlined_call_operand.hbm [shape: f32[16,16], index: 1, kind: input, shape index: {}]
  %s2 = inlined_call_operand.vmem [shape: f32[16,8], index: 2, kind: input, shape index: {}]
  %s3 = inlined_call_operand.hbm [shape: f32[4,32,32], index: 3, kind: input, shape index: {}]
  %s4 = inlined_call_operand.hbm [shape: f32[4,1,32], index: 4, kind: input, shape index: {}]
  %s5 = inlined_call_operand.vmem [shape: f32[32,32], index: 5, kind: input, shape index: {}]
  %s6 = inlined_call_operand.vmem [shape: f32[1,32], index: 6, kind: input, shape index: {}]
  %s7 = inlined_call_operand.hbm [shape: f32[16,16], index: 7, kind: input, shape index: {}]
  %s8 = inlined_call_operand.vmem [shape: f32[1,16], index: 8, kind: input, shape index: {}]
  %s9 = inlined_call_operand.hbm [shape: f32[16,48], index: 9, kind: output, shape index: {0}]
  %s10 = inlined_call_operand.vmem [shape: f32[16,8], index: 10, kind: output, shape index: {1}]
  %11 = xla_tuple %s9, %s10
  %s12 = sld [smem:[#allocation0]]
  $region89: #{tpu_custom_call.1} parent=0
    _
  %s14 = ssub.s32 1, %s12
  %s15 = scalar_select 0, %s14, %s12
  %s16 = sshll.u32 %s0, 4
  %s17 = int_to_ptr.vmem [resolvable:$true] %s16
  %19 = dma.vmem_to_smem %s17, 16, [#allocation3], [#allocation2]
  %20 = dma.done [#allocation2], 16
  %21 = sfence
  $region1: #{tpu_custom_call.1} parent=0
    #allocation4 [shape = 'u8[8192]{0}', space=vmem, size = 0x2000, scoped, tag = 'input window, operand 1']
    #allocation5 [shape = 's32[2]{0}', space=sflag, size = 0x8, scoped, tag = 'scoped memory for tpu_custom_call.1']
    #allocation6 [shape = 's32[2]{0}', space=sflag, size = 0x8, scoped, tag = 'scoped memory for tpu_custom_call.1']
    #allocation7 [shape = 'u8[65536]{0}', space=vmem, size = 0x10000, scoped, tag = 'input window, operand 3, single buffered']
    #allocation8 [shape = 's32[1]{0}', space=sflag, size = 0x4, scoped, tag = 'scoped memory for tpu_custom_call.1']
    #allocation9 [shape = 'u8[2048]{0}', space=vmem, size = 0x800, scoped, tag = 'input window, operand 4, single buffered']
    #allocation10 [shape = 'u8[8192]{0}', space=vmem, size = 0x2000, scoped, tag = 'input window, operand 7, single buffered']
    #allocation11 [shape = 's32[1]{0}', space=sflag, size = 0x4, scoped, tag = 'scoped memory for tpu_custom_call.1']
    #allocation12 [shape = 'u8[8192]{0}', space=vmem, size = 0x2000, scoped, tag = 'output window, operand 0']
    %22 = vsyncpa [#allocation5], 0
    %s23 = scalar_lea.sflag [#allocation5], 1
    %24 = vsyncpa %s23, 0
    %25 = vsyncpa [#allocation8], 0
    %26 = vsyncpa [#allocation11], 0
    %27 = vsyncpa [#allocation6], 0
    %s28 = scalar_lea.sflag [#allocation6], 1
    %29 = vsyncpa %s28, 0
    loop: start=0, step=1, limit=4
    $region2: #{tpu_custom_call.1} parent=1 // loop_pre_header
      _
    $region3: #{tpu_custom_call.1} parent=1 // loop_header
      %s31 = sphi 0, %s35
      %p32 = scmp.ge.s32.totalorder %s31, 4
      %s41 = sphi 0, %s43
      %s44 = sphi 0, %s41
      %s45 = sphi 0, %s44
      %s61 = sphi 0, %s45
      %s67 = sphi 0, %s69
      %s70 = sphi 0, %s67
      %s71 = sphi 0, %s70
      %s87 = sphi 0, %s71
      %s91 = sphi 0, %s91
      %s93 = sphi 0, %s91
      %s94 = sphi 0, %s93
      %s108 = sphi 0, %s94
      %s112 = sphi 0, %s112
      %s114 = sphi 0, %s112
      %s115 = sphi 0, %s114
      %s129 = sphi 0, %s115
      %s133 = sphi 0, %s133
      %s135 = sphi 0, %s133
      %s136 = sphi 0, %s135
      %s150 = sphi 0, %s136
      %s154 = sphi 0, %s154
      %s156 = sphi 0, %s154
      %s157 = sphi 0, %s156
      %s171 = sphi 0, %s157
      %s175 = sphi 0, %s175
      %s177 = sphi 0, %s175
      %s178 = sphi 0, %s177
      %s192 = sphi 0, %s178
      %s196 = sphi 0, %s196
      %s198 = sphi 0, %s196
      %s199 = sphi 0, %s198
      %s213 = sphi 0, %s199
      %s219 = sphi 0, %s221
      %s222 = sphi 0, %s219
      %s223 = sphi 0, %s222
      %s239 = sphi 0, %s223
      %s245 = sphi 0, %s247
      %s248 = sphi 0, %s245
      %s249 = sphi 0, %s248
      %s265 = sphi 0, %s249
    $region4: #{tpu_custom_call.1} parent=1 // loop_header_branch
      %34 = sbr.rel (%p32) target = $region8
    $region5: #{tpu_custom_call.1} parent=1 // loop_body
      %s36 = ssub.s32 %s31, 1
      %s37 = ssub.s32 %s31, 2
      %s38 = sadd.s32 %s31, 1
      %s39 = ssub.s32 %s31, %s38
      %p40 = scmp.eq.s32.totalorder %s39, 0
      %s42 = sadd.s32 %s41, 1
      %s43 = scalar_select %p40, %s41, %s42
      %p46 = pneg %p40
      %p47 = scmp.eq.s32.totalorder %s31, 1
      %p48 = por %p46, %p47
      %p49 = scmp.ne.s32.totalorder %s41, %s44
      %p50 = scmp.eq.s32.totalorder %s31, 0
      %p51 = por %p49, %p50
      %p52 = scmp.ne.s32.totalorder %s41, %s44
      %p53 = scmp.eq.s32.totalorder %s36, 1
      %p54 = por %p52, %p53
      %p55 = scmp.ne.s32.totalorder %s44, %s45
      %p56 = scmp.eq.s32.totalorder %s36, 0
      %p57 = por %p55, %p56
      %p58 = scmp.ne.s32.totalorder %s44, %s45
      %p59 = scmp.eq.s32.totalorder %s37, 1
      %p60 = por %p58, %p59
      %p62 = scmp.ne.s32.totalorder %s45, %s61
      %p63 = scmp.eq.s32.totalorder %s37, 0
      %p64 = por %p62, %p63
      %s65 = ssub.s32 %s31, %s38
      %p66 = scmp.eq.s32.totalorder %s65, 0
      %s68 = sadd.s32 %s67, 1
      %s69 = scalar_select %p66, %s67, %s68
      %p72 = pneg %p66
      %p73 = scmp.eq.s32.totalorder %s31, 1
      %p74 = por %p72, %p73
      %p75 = scmp.ne.s32.totalorder %s67, %s70
      %p76 = scmp.eq.s32.totalorder %s31, 0
      %p77 = por %p75, %p76
      %p78 = scmp.ne.s32.totalorder %s67, %s70
      %p79 = scmp.eq.s32.totalorder %s36, 1
      %p80 = por %p78, %p79
      %p81 = scmp.ne.s32.totalorder %s70, %s71
      %p82 = scmp.eq.s32.totalorder %s36, 0
      %p83 = por %p81, %p82
      %p84 = scmp.ne.s32.totalorder %s70, %s71
      %p85 = scmp.eq.s32.totalorder %s37, 1
      %p86 = por %p84, %p85
      %p88 = scmp.ne.s32.totalorder %s71, %s87
      %p89 = scmp.eq.s32.totalorder %s37, 0
      %p90 = por %p88, %p89
      %s92 = sadd.s32 %s91, 1
      %p95 = scmp.eq.s32.totalorder %s31, 1
      %p96 = scmp.ne.s32.totalorder %s91, %s93
      %p97 = scmp.eq.s32.totalorder %s31, 0
      %p98 = por %p96, %p97
      %p99 = scmp.ne.s32.totalorder %s91, %s93
      %p100 = scmp.eq.s32.totalorder %s36, 1
      %p101 = por %p99, %p100
      %p102 = scmp.ne.s32.totalorder %s93, %s94
      %p103 = scmp.eq.s32.totalorder %s36, 0
      %p104 = por %p102, %p103
      %p105 = scmp.ne.s32.totalorder %s93, %s94
      %p106 = scmp.eq.s32.totalorder %s37, 1
      %p107 = por %p105, %p106
      %p109 = scmp.ne.s32.totalorder %s94, %s108
      %p110 = scmp.eq.s32.totalorder %s37, 0
      %p111 = por %p109, %p110
      %s113 = sadd.s32 %s112, 1
      %p116 = scmp.eq.s32.totalorder %s31, 1
      %p117 = scmp.ne.s32.totalorder %s112, %s114
      %p118 = scmp.eq.s32.totalorder %s31, 0
      %p119 = por %p117, %p118
      %p120 = scmp.ne.s32.totalorder %s112, %s114
      %p121 = scmp.eq.s32.totalorder %s36, 1
      %p122 = por %p120, %p121
      %p123 = scmp.ne.s32.totalorder %s114, %s115
      %p124 = scmp.eq.s32.totalorder %s36, 0
      %p125 = por %p123, %p124
      %p126 = scmp.ne.s32.totalorder %s114, %s115
      %p127 = scmp.eq.s32.totalorder %s37, 1
      %p128 = por %p126, %p127
      %p130 = scmp.ne.s32.totalorder %s115, %s129
      %p131 = scmp.eq.s32.totalorder %s37, 0
      %p132 = por %p130, %p131
      %s134 = sadd.s32 %s133, 1
      %p137 = scmp.eq.s32.totalorder %s31, 1
      %p138 = scmp.ne.s32.totalorder %s133, %s135
      %p139 = scmp.eq.s32.totalorder %s31, 0
      %p140 = por %p138, %p139
      %p141 = scmp.ne.s32.totalorder %s133, %s135
      %p142 = scmp.eq.s32.totalorder %s36, 1
      %p143 = por %p141, %p142
      %p144 = scmp.ne.s32.totalorder %s135, %s136
      %p145 = scmp.eq.s32.totalorder %s36, 0
      %p146 = por %p144, %p145
      %p147 = scmp.ne.s32.totalorder %s135, %s136
      %p148 = scmp.eq.s32.totalorder %s37, 1
      %p149 = por %p147, %p148
      %p151 = scmp.ne.s32.totalorder %s136, %s150
      %p152 = scmp.eq.s32.totalorder %s37, 0
      %p153 = por %p151, %p152
      %s155 = sadd.s32 %s154, 1
      %p158 = scmp.eq.s32.totalorder %s31, 1
      %p159 = scmp.ne.s32.totalorder %s154, %s156
      %p160 = scmp.eq.s32.totalorder %s31, 0
      %p161 = por %p159, %p160
      %p162 = scmp.ne.s32.totalorder %s154, %s156
      %p163 = scmp.eq.s32.totalorder %s36, 1
      %p164 = por %p162, %p163
      %p165 = scmp.ne.s32.totalorder %s156, %s157
      %p166 = scmp.eq.s32.totalorder %s36, 0
      %p167 = por %p165, %p166
      %p168 = scmp.ne.s32.totalorder %s156, %s157
      %p169 = scmp.eq.s32.totalorder %s37, 1
      %p170 = por %p168, %p169
      %p172 = scmp.ne.s32.totalorder %s157, %s171
      %p173 = scmp.eq.s32.totalorder %s37, 0
      %p174 = por %p172, %p173
      %s176 = sadd.s32 %s175, 1
      %p179 = scmp.eq.s32.totalorder %s31, 1
      %p180 = scmp.ne.s32.totalorder %s175, %s177
      %p181 = scmp.eq.s32.totalorder %s31, 0
      %p182 = por %p180, %p181
      %p183 = scmp.ne.s32.totalorder %s175, %s177
      %p184 = scmp.eq.s32.totalorder %s36, 1
      %p185 = por %p183, %p184
      %p186 = scmp.ne.s32.totalorder %s177, %s178
      %p187 = scmp.eq.s32.totalorder %s36, 0
      %p188 = por %p186, %p187
      %p189 = scmp.ne.s32.totalorder %s177, %s178
      %p190 = scmp.eq.s32.totalorder %s37, 1
      %p191 = por %p189, %p190
      %p193 = scmp.ne.s32.totalorder %s178, %s192
      %p194 = scmp.eq.s32.totalorder %s37, 0
      %p195 = por %p193, %p194
      %s197 = sadd.s32 %s196, 1
      %p200 = scmp.eq.s32.totalorder %s31, 1
      %p201 = scmp.ne.s32.totalorder %s196, %s198
      %p202 = scmp.eq.s32.totalorder %s31, 0
      %p203 = por %p201, %p202
      %p204 = scmp.ne.s32.totalorder %s196, %s198
      %p205 = scmp.eq.s32.totalorder %s36, 1
      %p206 = por %p204, %p205
      %p207 = scmp.ne.s32.totalorder %s198, %s199
      %p208 = scmp.eq.s32.totalorder %s36, 0
      %p209 = por %p207, %p208
      %p210 = scmp.ne.s32.totalorder %s198, %s199
      %p211 = scmp.eq.s32.totalorder %s37, 1
      %p212 = por %p210, %p211
      %p214 = scmp.ne.s32.totalorder %s199, %s213
      %p215 = scmp.eq.s32.totalorder %s37, 0
      %p216 = por %p214, %p215
      %s217 = ssub.s32 %s31, %s38
      %p218 = scmp.eq.s32.totalorder %s217, 0
      %s220 = sadd.s32 %s219, 1
      %s221 = scalar_select %p218, %s219, %s220
      %p224 = pneg %p218
      %p225 = scmp.eq.s32.totalorder %s31, 1
      %p226 = por %p224, %p225
      %p227 = scmp.ne.s32.totalorder %s219, %s222
      %p228 = scmp.eq.s32.totalorder %s31, 0
      %p229 = por %p227, %p228
      %p230 = scmp.ne.s32.totalorder %s219, %s222
      %p231 = scmp.eq.s32.totalorder %s36, 1
      %p232 = por %p230, %p231
      %p233 = scmp.ne.s32.totalorder %s222, %s223
      %p234 = scmp.eq.s32.totalorder %s36, 0
      %p235 = por %p233, %p234
      %p236 = scmp.ne.s32.totalorder %s222, %s223
      %p237 = scmp.eq.s32.totalorder %s37, 1
      %p238 = por %p236, %p237
      %p240 = scmp.ne.s32.totalorder %s223, %s239
      %p241 = scmp.eq.s32.totalorder %s37, 0
      %p242 = por %p240, %p241
      %s243 = ssub.s32 %s31, %s38
      %p244 = scmp.eq.s32.totalorder %s243, 0
      %s246 = sadd.s32 %s245, 1
      %s247 = scalar_select %p244, %s245, %s246
      %p250 = pneg %p244
      %p251 = scmp.eq.s32.totalorder %s31, 1
      %p252 = por %p250, %p251
      %p253 = scmp.ne.s32.totalorder %s245, %s248
      %p254 = scmp.eq.s32.totalorder %s31, 0
      %p255 = por %p253, %p254
      %p256 = scmp.ne.s32.totalorder %s245, %s248
      %p257 = scmp.eq.s32.totalorder %s36, 1
      %p258 = por %p256, %p257
      %p259 = scmp.ne.s32.totalorder %s248, %s249
      %p260 = scmp.eq.s32.totalorder %s36, 0
      %p261 = por %p259, %p260
      %p262 = scmp.ne.s32.totalorder %s248, %s249
      %p263 = scmp.eq.s32.totalorder %s37, 1
      %p264 = por %p262, %p263
      %p266 = scmp.ne.s32.totalorder %s249, %s265
      %p267 = scmp.eq.s32.totalorder %s37, 0
      %p268 = por %p266, %p267
      %p269 = scmp.le.s32.totalorder 1, %s31
      %p270 = scmp.lt.s32.totalorder %s31, 3
      %p271 = pnand %p269, %p270
      %p272 = pneg %p271
      // Predicated region
      $region9: #{tpu_custom_call.1} parent=5 // pred_check
        _
      $region10: #{tpu_custom_call.1} parent=5 // pred_check_branch
        %274 = sbr.rel (%p271) target = $region12
      $region11: #{tpu_custom_call.1} parent=5 // pred_region
        %s275 = ssub.s32 %s31, 1
        // Predicated region
        $region13: #{tpu_custom_call.1} parent=11 // pred_check
          %p276 = pneg %p104
        $region14: #{tpu_custom_call.1} parent=11 // pred_check_branch
          %278 = sbr.rel (%p276) target = $region16
        $region15: #{tpu_custom_call.1} parent=11 // pred_region
          %s280 = ssub.s32 2048, 2048
          %281 = vsyncadd [#allocation8], %s280
          %s282 = sshll.u32 [#allocation7], 4
          %s283 = int_to_ptr.vmem [resolvable:$true] %s282
          %288 = dma.hbm_to_vmem [thread:$0]  %s3, 2048, %s283, [#allocation8], 128, 128, 8
        $region16: #{tpu_custom_call.1} parent=11 // pred_fallthru
          _
        // Predicated region
        $region17: #{tpu_custom_call.1} parent=11 // pred_check
          %p289 = pneg %p125
        $region18: #{tpu_custom_call.1} parent=11 // pred_check_branch
          %291 = sbr.rel (%p289) target = $region20
        $region19: #{tpu_custom_call.1} parent=11 // pred_region
          %s293 = ssub.s32 64, 64
          %294 = vsyncadd [#allocation8], %s293
          %s295 = sshll.u32 [#allocation9], 4
          %s296 = int_to_ptr.vmem [resolvable:$true] %s295
          %301 = dma.hbm_to_vmem [thread:$0]  %s4, 64, %s296, [#allocation8], 16, 16, 1
        $region20: #{tpu_custom_call.1} parent=11 // pred_fallthru
          _
        // Predicated region
        $region21: #{tpu_custom_call.1} parent=11 // pred_check
          %p302 = pneg %p146
        $region22: #{tpu_custom_call.1} parent=11 // pred_check_branch
          %304 = sbr.rel (%p302) target = $region24
        $region23: #{tpu_custom_call.1} parent=11 // pred_region
          _
        $region24: #{tpu_custom_call.1} parent=11 // pred_fallthru
          _
        // Predicated region
        $region25: #{tpu_custom_call.1} parent=11 // pred_check
          %p305 = pneg %p167
        $region26: #{tpu_custom_call.1} parent=11 // pred_check_branch
          %307 = sbr.rel (%p305) target = $region28
        $region27: #{tpu_custom_call.1} parent=11 // pred_region
          _
        $region28: #{tpu_custom_call.1} parent=11 // pred_fallthru
          _
        // Predicated region
        $region29: #{tpu_custom_call.1} parent=11 // pred_check
          %p308 = pneg %p188
        $region30: #{tpu_custom_call.1} parent=11 // pred_check_branch
          %310 = sbr.rel (%p308) target = $region32
        $region31: #{tpu_custom_call.1} parent=11 // pred_region
          %s312 = ssub.s32 256, 256
          %313 = vsyncadd [#allocation11], %s312
          %s314 = sshll.u32 [#allocation10], 4
          %s315 = int_to_ptr.vmem [resolvable:$true] %s314
          %320 = dma.hbm_to_vmem [thread:$0]  %s7, 256, %s315, [#allocation11], 128, 128, 8
        $region32: #{tpu_custom_call.1} parent=11 // pred_fallthru
          _
        // Predicated region
        $region33: #{tpu_custom_call.1} parent=11 // pred_check
          %p321 = pneg %p209
        $region34: #{tpu_custom_call.1} parent=11 // pred_check_branch
          %323 = sbr.rel (%p321) target = $region36
        $region35: #{tpu_custom_call.1} parent=11 // pred_region
          _
        $region36: #{tpu_custom_call.1} parent=11 // pred_fallthru
          _
      $region12: #{tpu_custom_call.1} parent=5 // pred_fallthru
        _
      %p324 = scmp.lt.s32.totalorder %s31, 2
      // Predicated region
      $region37: #{tpu_custom_call.1} parent=5 // pred_check
        %p325 = pneg %p324
      $region38: #{tpu_custom_call.1} parent=5 // pred_check_branch
        %327 = sbr.rel (%p325) target = $region40
      $region39: #{tpu_custom_call.1} parent=5 // pred_region
        // Predicated region
        $region41: #{tpu_custom_call.1} parent=39 // pred_check
          %p328 = pneg %p51
        $region42: #{tpu_custom_call.1} parent=39 // pred_check_branch
          %330 = sbr.rel (%p328) target = $region44
        $region43: #{tpu_custom_call.1} parent=39 // pred_region
          %s331 = sand.u32 %s41, 1
          %s332 = scalar_lea.sflag [#allocation5], %s331
          %s333 = sand.u32 %s41, 1
          %s334 = smul.addr %s333, 8
          %s335 = scalar_lea.vmem [#allocation4], %s334
          %s337 = ssub.s32 128, 128
          %338 = vsyncadd %s332, %s337
          %s339 = smul.addr %s31, 128
          %s340 = scalar_lea.hbm %s1, %s339
          %s342 = sshll.u32 %s335, 4
          %s343 = int_to_ptr.vmem [resolvable:$true] %s342
          %345 = dma.hbm_to_vmem [thread:$0]  %s340, 128, %s343, %s332
        $region44: #{tpu_custom_call.1} parent=39 // pred_fallthru
          _
        // Predicated region
        $region45: #{tpu_custom_call.1} parent=39 // pred_check
          %p346 = pneg %p77
        $region46: #{tpu_custom_call.1} parent=39 // pred_check_branch
          %348 = sbr.rel (%p346) target = $region48
        $region47: #{tpu_custom_call.1} parent=39 // pred_region
          %p349 = scmp.lt.s32.totalorder %s31, 1
          %s350 = scalar_select %p349, %s31, 1
          %s351 = smul.addr %s350, 8
          %s352 = scalar_lea.vmem %s2, %s351
        $region48: #{tpu_custom_call.1} parent=39 // pred_fallthru
          _
      $region40: #{tpu_custom_call.1} parent=5 // pred_fallthru
        _
      %p353 = scmp.le.s32.totalorder 1, %s31
      %p354 = scmp.lt.s32.totalorder %s31, 3
      %p355 = pnand %p353, %p354
      %p356 = pneg %p355
      // Predicated region
      $region49: #{tpu_custom_call.1} parent=5 // pred_check
        _
      $region50: #{tpu_custom_call.1} parent=5 // pred_check_branch
        %358 = sbr.rel (%p355) target = $region52
      $region51: #{tpu_custom_call.1} parent=5 // pred_region
        %s359 = ssub.s32 %s31, 1
        %s360 = sand.u32 %s44, 1
        %s361 = scalar_lea.sflag [#allocation5], %s360
        %s362 = sand.u32 %s44, 1
        %s363 = smul.addr %s362, 8
        %s364 = scalar_lea.vmem [#allocation4], %s363
        // Predicated region
        $region53: #{tpu_custom_call.1} parent=51 // pred_check
          %p365 = pneg %p57
        $region54: #{tpu_custom_call.1} parent=51 // pred_check_branch
          %367 = sbr.rel (%p365) target = $region56
        $region55: #{tpu_custom_call.1} parent=51 // pred_region
          %368 = dma.done %s361, 128
        $region56: #{tpu_custom_call.1} parent=51 // pred_fallthru
          _
        // Predicated region
        $region57: #{tpu_custom_call.1} parent=51 // pred_check
          %p369 = pneg %p104
        $region58: #{tpu_custom_call.1} parent=51 // pred_check_branch
          %371 = sbr.rel (%p369) target = $region60
        $region59: #{tpu_custom_call.1} parent=51 // pred_region
          %372 = dma.done [#allocation8], 2048
        $region60: #{tpu_custom_call.1} parent=51 // pred_fallthru
          _
        // Predicated region
        $region61: #{tpu_custom_call.1} parent=51 // pred_check
          %p373 = pneg %p125
        $region62: #{tpu_custom_call.1} parent=51 // pred_check_branch
          %375 = sbr.rel (%p373) target = $region64
        $region63: #{tpu_custom_call.1} parent=51 // pred_region
          %376 = dma.done [#allocation8], 64
        $region64: #{tpu_custom_call.1} parent=51 // pred_fallthru
          _
        // Predicated region
        $region65: #{tpu_custom_call.1} parent=51 // pred_check
          %p377 = pneg %p188
        $region66: #{tpu_custom_call.1} parent=51 // pred_check_branch
          %379 = sbr.rel (%p377) target = $region68
        $region67: #{tpu_custom_call.1} parent=51 // pred_region
          %380 = dma.done [#allocation11], 256
        $region68: #{tpu_custom_call.1} parent=51 // pred_fallthru
          _
        %s381 = sand.u32 %s44, 1
        %s382 = scalar_lea.sflag [#allocation5], %s381
        %s383 = sand.u32 %s44, 1
        %s384 = smul.addr %s383, 8
        %s385 = scalar_lea.vmem [#allocation4], %s384
        %p386 = pneg %p57
        %p387 = pneg %p54
        %p388 = scmp.lt.s32.totalorder %s36, 1
        %s389 = scalar_select %p388, %s36, 1
        %s390 = smul.addr %s389, 8
        %s391 = scalar_lea.vmem %s2, %s390
        %p392 = pneg %p83
        %p393 = pneg %p80
        %p394 = pneg %p104
        %p395 = pneg %p101
        %p396 = pneg %p125
        %p397 = pneg %p122
        %p398 = pneg %p146
        %p399 = pneg %p143
        %p400 = pneg %p167
        %p401 = pneg %p164
        %p402 = pneg %p188
        %p403 = pneg %p185
        %p404 = pneg %p209
        %p405 = pneg %p206
        %p406 = pneg %p235
        %p407 = pneg %p232
        %s408 = sand.u32 %s222, 1
        %s409 = scalar_lea.sflag [#allocation6], %s408
        %s410 = sand.u32 %s222, 1
        %s411 = smul.addr %s410, 8
        %s412 = scalar_lea.vmem [#allocation12], %s411
        %p413 = pneg %p261
        %p414 = pneg %p258
        %p415 = scmp.lt.s32.totalorder %s36, 1
        %s416 = scalar_select %p415, %s36, 1
        %s417 = smul.addr %s416, 8
        %s418 = scalar_lea.vmem %s10, %s417
        %p419 = scmp.lt.s32.totalorder %s36, 1
        %s420 = scalar_select %p419, %s36, 1
        %s421 = smul.addr %s420, 8
        %s422 = scalar_lea.vmem %s2, %s421
        %p423 = scmp.lt.s32.totalorder %s36, 1
        %s424 = scalar_select %p423, %s36, 1
        %s425 = smul.addr %s424, 8
        %s426 = scalar_lea.vmem %s10, %s425
        %v427 = vld [vmem:[%s422] sm:$0xff]
        %v428 = vld [vmem:[%s364] sm:$0xff]
        %s429 = sld [smem:[#allocation3]]
        %s430 = sadd.f32 %s429, 1.0
        %v431 = vstv %s430
        %v432 = vmul.f32 %v431, %v428
        %vm433 = vcmask 64512
        %v435 = vsel %vm433, %v427, 0
        %437 = vmatprep.subr.mxu0 0.0
        %438 = vmatpush1.msra.mxu0 0.0
        %439 = vmatprep.subr.mxu0 0.0
        %440 = vmatpush1.msra.mxu0 0.0
        %441 = vmatprep.subr.mxu0 0.0
        %442 = vmatpush1.msra.mxu0 0.0
        %443 = vmatprep.subr.mxu0 0.0
        %444 = vmatpush1.msra.mxu0 0.0
        %445 = vmatprep.subr.mxu0 0.0
        %446 = vmatpush1.msra.mxu0 0.0
        %447 = vmatprep.subr.mxu0 0.0
        %448 = vmatpush1.msra.mxu0 0.0
        %449 = vmatprep.subr.mxu0 0.0
        %450 = vmatpush1.msra.mxu0 0.0
        %451 = vmatprep.subr.mxu0 0.0
        %452 = vmatpush1.msra.mxu0 0.0
        %453 = vmatprep.subr.mxu0 0.0
        %454 = vmatpush1.msra.mxu0 0.0
        %455 = vmatprep.subr.mxu0 0.0
        %456 = vmatpush1.msra.mxu0 0.0
        %457 = vmatprep.subr.mxu0 0.0
        %458 = vmatpush1.msra.mxu0 0.0
        %459 = vmatprep.subr.mxu0 0.0
        %460 = vmatpush1.msra.mxu0 0.0
        %461 = vmatprep.subr.mxu0 0.0
        %462 = vmatpush1.msra.mxu0 0.0
        %463 = vmatprep.subr.mxu0 0.0
        %464 = vmatpush1.msra.mxu0 0.0
        %465 = vmatprep.subr.mxu0 0.0
        %466 = vmatpush1.msra.mxu0 0.0
        %467 = vmatprep.subr.mxu0 0.0
        %468 = vmatpush1.msra.mxu0 %v428
        %469 = vmatprep.subr.mxu0 0.0
        %470 = vmatpush2.msra.mxu0 0.0
        %471 = vmatprep.subr.mxu0 0.0
        %472 = vmatpush2.msra.mxu0 0.0
        %473 = vmatprep.subr.mxu0 0.0
        %474 = vmatpush2.msra.mxu0 0.0
        %475 = vmatprep.subr.mxu0 0.0
        %476 = vmatpush2.msra.mxu0 0.0
        %477 = vmatprep.subr.mxu0 0.0
        %478 = vmatpush2.msra.mxu0 0.0
        %479 = vmatprep.subr.mxu0 0.0
        %480 = vmatpush2.msra.mxu0 0.0
        %481 = vmatprep.subr.mxu0 0.0
        %482 = vmatpush2.msra.mxu0 0.0
        %483 = vmatprep.subr.mxu0 0.0
        %484 = vmatpush2.msra.mxu0 0.0
        %485 = vmatprep.subr.mxu0 0.0
        %486 = vmatpush2.msra.mxu0 0.0
        %487 = vmatprep.subr.mxu0 0.0
        %488 = vmatpush2.msra.mxu0 0.0
        %489 = vmatprep.subr.mxu0 0.0
        %490 = vmatpush2.msra.mxu0 0.0
        %491 = vmatprep.subr.mxu0 0.0
        %492 = vmatpush2.msra.mxu0 0.0
        %493 = vmatprep.subr.mxu0 0.0
        %494 = vmatpush2.msra.mxu0 0.0
        %495 = vmatprep.subr.mxu0 0.0
        %496 = vmatpush2.msra.mxu0 0.0
        %497 = vmatprep.subr.mxu0 0.0
        %498 = vmatpush2.msra.mxu0 0.0
        %499 = vmatprep.subr.mxu0 0.0
        %500 = vmatpush2.msra.mxu0 0.0
        %501 = vmatprep.mubr.f32.mxu0 0.0
        %502 = vmatmul.mubr.f32.gmra.mxu0 %v435
        %v503 = vpop.f32.mrf.mxu0
        %v504 = vadd.f32 %v432, %v503
        %v505 = vpop.f32.mrf.mxu0
        %506 = vdwg.mxu0
        %v507 = vld [vmem:[#allocation7] sm:$0xff]
        %v508 = vld [vmem:[#allocation7 + $0x8] sm:$0xff]
        %v509 = vld [vmem:[#allocation9] sm:$0x1]
        %v511 = vlaneseq
        %v512 = vshrl.u32 %v511, 7
        %v513 = vsub.s32 0, %v512
        %v514 = vrot.slane %v509, %v513
        %vm516 = vcmask 130048
        %v518 = vsel %vm516, %v504, 0
        %520 = vmatprep.subr.mxu0 0.0
        %521 = vmatpush1.msra.mxu0 0.0
        %522 = vmatprep.subr.mxu0 0.0
        %523 = vmatpush1.msra.mxu0 0.0
        %524 = vmatprep.subr.mxu0 0.0
        %525 = vmatpush1.msra.mxu0 0.0
        %526 = vmatprep.subr.mxu0 0.0
        %527 = vmatpush1.msra.mxu0 0.0
        %528 = vmatprep.subr.mxu0 0.0
        %529 = vmatpush1.msra.mxu0 0.0
        %530 = vmatprep.subr.mxu0 0.0
        %531 = vmatpush1.msra.mxu0 0.0
        %532 = vmatprep.subr.mxu0 0.0
        %533 = vmatpush1.msra.mxu0 0.0
        %534 = vmatprep.subr.mxu0 0.0
        %535 = vmatpush1.msra.mxu0 0.0
        %536 = vmatprep.subr.mxu0 0.0
        %537 = vmatpush1.msra.mxu0 0.0
        %538 = vmatprep.subr.mxu0 0.0
        %539 = vmatpush1.msra.mxu0 0.0
        %540 = vmatprep.subr.mxu0 0.0
        %541 = vmatpush1.msra.mxu0 0.0
        %542 = vmatprep.subr.mxu0 0.0
        %543 = vmatpush1.msra.mxu0 0.0
        %544 = vmatprep.subr.mxu0 0.0
        %545 = vmatpush1.msra.mxu0 0.0
        %546 = vmatprep.subr.mxu0 0.0
        %547 = vmatpush1.msra.mxu0 0.0
        %548 = vmatprep.subr.mxu0 0.0
        %549 = vmatpush1.msra.mxu0 %v508
        %550 = vmatprep.subr.mxu0 0.0
        %551 = vmatpush1.msra.mxu0 %v507
        %552 = vmatprep.subr.mxu0 0.0
        %553 = vmatpush2.msra.mxu0 0.0
        %554 = vmatprep.subr.mxu0 0.0
        %555 = vmatpush2.msra.mxu0 0.0
        %556 = vmatprep.subr.mxu0 0.0
        %557 = vmatpush2.msra.mxu0 0.0
        %558 = vmatprep.subr.mxu0 0.0
        %559 = vmatpush2.msra.mxu0 0.0
        %560 = vmatprep.subr.mxu0 0.0
        %561 = vmatpush2.msra.mxu0 0.0
        %562 = vmatprep.subr.mxu0 0.0
        %563 = vmatpush2.msra.mxu0 0.0
        %564 = vmatprep.subr.mxu0 0.0
        %565 = vmatpush2.msra.mxu0 0.0
        %566 = vmatprep.subr.mxu0 0.0
        %567 = vmatpush2.msra.mxu0 0.0
        %568 = vmatprep.subr.mxu0 0.0
        %569 = vmatpush2.msra.mxu0 0.0
        %570 = vmatprep.subr.mxu0 0.0
        %571 = vmatpush2.msra.mxu0 0.0
        %572 = vmatprep.subr.mxu0 0.0
        %573 = vmatpush2.msra.mxu0 0.0
        %574 = vmatprep.subr.mxu0 0.0
        %575 = vmatpush2.msra.mxu0 0.0
        %576 = vmatprep.subr.mxu0 0.0
        %577 = vmatpush2.msra.mxu0 0.0
        %578 = vmatprep.subr.mxu0 0.0
        %579 = vmatpush2.msra.mxu0 0.0
        %580 = vmatprep.subr.mxu0 0.0
        %581 = vmatpush2.msra.mxu0 0.0
        %582 = vmatprep.subr.mxu0 0.0
        %583 = vmatpush2.msra.mxu0 0.0
        %584 = vmatprep.mubr.f32.mxu0 0.0
        %585 = vmatmul.mubr.f32.gmra.mxu0 %v518
        %v586 = vpop.f32.mrf.mxu0
        %v587 = vadd.f32 %v514, %v586
        %v588 = vpop.f32.mrf.mxu0
        %589 = vdwg.mxu0
        %v590 = vmax.f32 %v587, 0.0
        %s591 = scalar_lea.vmem [#allocation7], 32
        %v592 = vld [vmem:[%s591] sm:$0xff]
        %v593 = vld [vmem:[%s591 + $0x8] sm:$0xff]
        %v594 = vld [vmem:[%s591 + $0x10] sm:$0xff]
        %v595 = vld [vmem:[%s591 + $0x18] sm:$0xff]
        %s596 = scalar_lea.vmem [#allocation9], 1
        %v597 = vld [vmem:[%s596] sm:$0x1]
        %v599 = vlaneseq
        %v600 = vshrl.u32 %v599, 7
        %v601 = vsub.s32 0, %v600
        %v602 = vrot.slane %v597, %v601
        %vm604 = vcmask 261120
        %v606 = vsel %vm604, %v590, 0
        %608 = vmatprep.subr.mxu0 0.0
        %609 = vmatpush1.msra.mxu0 0.0
        %610 = vmatprep.subr.mxu0 0.0
        %611 = vmatpush1.msra.mxu0 0.0
        %612 = vmatprep.subr.mxu0 0.0
        %613 = vmatpush1.msra.mxu0 0.0
        %614 = vmatprep.subr.mxu0 0.0
        %615 = vmatpush1.msra.mxu0 0.0
        %616 = vmatprep.subr.mxu0 0.0
        %617 = vmatpush1.msra.mxu0 0.0
        %618 = vmatprep.subr.mxu0 0.0
        %619 = vmatpush1.msra.mxu0 0.0
        %620 = vmatprep.subr.mxu0 0.0
        %621 = vmatpush1.msra.mxu0 0.0
        %622 = vmatprep.subr.mxu0 0.0
        %623 = vmatpush1.msra.mxu0 0.0
        %624 = vmatprep.subr.mxu0 0.0
        %625 = vmatpush1.msra.mxu0 0.0
        %626 = vmatprep.subr.mxu0 0.0
        %627 = vmatpush1.msra.mxu0 0.0
        %628 = vmatprep.subr.mxu0 0.0
        %629 = vmatpush1.msra.mxu0 0.0
        %630 = vmatprep.subr.mxu0 0.0
        %631 = vmatpush1.msra.mxu0 0.0
        %632 = vmatprep.subr.mxu0 0.0
        %633 = vmatpush1.msra.mxu0 %v595
        %634 = vmatprep.subr.mxu0 0.0
        %635 = vmatpush1.msra.mxu0 %v594
        %636 = vmatprep.subr.mxu0 0.0
        %637 = vmatpush1.msra.mxu0 %v593
        %638 = vmatprep.subr.mxu0 0.0
        %639 = vmatpush1.msra.mxu0 %v592
        %640 = vmatprep.subr.mxu0 0.0
        %641 = vmatpush2.msra.mxu0 0.0
        %642 = vmatprep.subr.mxu0 0.0
        %643 = vmatpush2.msra.mxu0 0.0
        %644 = vmatprep.subr.mxu0 0.0
        %645 = vmatpush2.msra.mxu0 0.0
        %646 = vmatprep.subr.mxu0 0.0
        %647 = vmatpush2.msra.mxu0 0.0
        %648 = vmatprep.subr.mxu0 0.0
        %649 = vmatpush2.msra.mxu0 0.0
        %650 = vmatprep.subr.mxu0 0.0
        %651 = vmatpush2.msra.mxu0 0.0
        %652 = vmatprep.subr.mxu0 0.0
        %653 = vmatpush2.msra.mxu0 0.0
        %654 = vmatprep.subr.mxu0 0.0
        %655 = vmatpush2.msra.mxu0 0.0
        %656 = vmatprep.subr.mxu0 0.0
        %657 = vmatpush2.msra.mxu0 0.0
        %658 = vmatprep.subr.mxu0 0.0
        %659 = vmatpush2.msra.mxu0 0.0
        %660 = vmatprep.subr.mxu0 0.0
        %661 = vmatpush2.msra.mxu0 0.0
        %662 = vmatprep.subr.mxu0 0.0
        %663 = vmatpush2.msra.mxu0 0.0
        %664 = vmatprep.subr.mxu0 0.0
        %665 = vmatpush2.msra.mxu0 0.0
        %666 = vmatprep.subr.mxu0 0.0
        %667 = vmatpush2.msra.mxu0 0.0
        %668 = vmatprep.subr.mxu0 0.0
        %669 = vmatpush2.msra.mxu0 0.0
        %670 = vmatprep.subr.mxu0 0.0
        %671 = vmatpush2.msra.mxu0 0.0
        %672 = vmatprep.mubr.f32.mxu0 0.0
        %673 = vmatmul.mubr.f32.gmra.mxu0 %v606
        %v674 = vpop.f32.mrf.mxu0
        %v675 = vadd.f32 %v602, %v674
        %v676 = vpop.f32.mrf.mxu0
        %677 = vdwg.mxu0
        %v678 = vmax.f32 %v675, 0.0
        %s679 = sld [smem:[#allocation3 + $0x1]]
        %s680 = sadd.f32 %s679, 1.0
        %v681 = vstv %s680
        %v682 = vmul.f32 %v681, %v678
        %683 = vmatprep.subr.mxu0 0.0
        %684 = vmatpush1.msra.mxu0 0.0
        %685 = vmatprep.subr.mxu0 0.0
        %686 = vmatpush1.msra.mxu0 0.0
        %687 = vmatprep.subr.mxu0 0.0
        %688 = vmatpush1.msra.mxu0 0.0
        %689 = vmatprep.subr.mxu0 0.0
        %690 = vmatpush1.msra.mxu0 0.0
        %691 = vmatprep.subr.mxu0 0.0
        %692 = vmatpush1.msra.mxu0 0.0
        %693 = vmatprep.subr.mxu0 0.0
        %694 = vmatpush1.msra.mxu0 0.0
        %695 = vmatprep.subr.mxu0 0.0
        %696 = vmatpush1.msra.mxu0 0.0
        %697 = vmatprep.subr.mxu0 0.0
        %698 = vmatpush1.msra.mxu0 0.0
        %699 = vmatprep.subr.mxu0 0.0
        %700 = vmatpush1.msra.mxu0 0.0
        %701 = vmatprep.subr.mxu0 0.0
        %702 = vmatpush1.msra.mxu0 0.0
        %703 = vmatprep.subr.mxu0 0.0
        %704 = vmatpush1.msra.mxu0 0.0
        %705 = vmatprep.subr.mxu0 0.0
        %706 = vmatpush1.msra.mxu0 0.0
        %707 = vmatprep.subr.mxu0 0.0
        %708 = vmatpush1.msra.mxu0 0.0
        %709 = vmatprep.subr.mxu0 0.0
        %710 = vmatpush1.msra.mxu0 0.0
        %711 = vmatprep.subr.mxu0 0.0
        %712 = vmatpush1.msra.mxu0 0.0
        %713 = vmatprep.subr.mxu0 0.0
        %714 = vmatpush1.msra.mxu0 %v678
        %715 = vmatprep.subr.mxu0 0.0
        %716 = vmatpush2.msra.mxu0 0.0
        %717 = vmatprep.subr.mxu0 0.0
        %718 = vmatpush2.msra.mxu0 0.0
        %719 = vmatprep.subr.mxu0 0.0
        %720 = vmatpush2.msra.mxu0 0.0
        %721 = vmatprep.subr.mxu0 0.0
        %722 = vmatpush2.msra.mxu0 0.0
        %723 = vmatprep.subr.mxu0 0.0
        %724 = vmatpush2.msra.mxu0 0.0
        %725 = vmatprep.subr.mxu0 0.0
        %726 = vmatpush2.msra.mxu0 0.0
        %727 = vmatprep.subr.mxu0 0.0
        %728 = vmatpush2.msra.mxu0 0.0
        %729 = vmatprep.subr.mxu0 0.0
        %730 = vmatpush2.msra.mxu0 0.0
        %731 = vmatprep.subr.mxu0 0.0
        %732 = vmatpush2.msra.mxu0 0.0
        %733 = vmatprep.subr.mxu0 0.0
        %734 = vmatpush2.msra.mxu0 0.0
        %735 = vmatprep.subr.mxu0 0.0
        %736 = vmatpush2.msra.mxu0 0.0
        %737 = vmatprep.subr.mxu0 0.0
        %738 = vmatpush2.msra.mxu0 0.0
        %739 = vmatprep.subr.mxu0 0.0
        %740 = vmatpush2.msra.mxu0 0.0
        %741 = vmatprep.subr.mxu0 0.0
        %742 = vmatpush2.msra.mxu0 0.0
        %743 = vmatprep.subr.mxu0 0.0
        %744 = vmatpush2.msra.mxu0 0.0
        %745 = vmatprep.subr.mxu0 0.0
        %746 = vmatpush2.msra.mxu0 0.0
        %747 = vmatprep.mubr.f32.mxu0 0.0
        %748 = vmatmul.mubr.f32.gmra.mxu0 %v435
        %v749 = vpop.f32.mrf.mxu0
        %v750 = vadd.f32 %v682, %v749
        %v751 = vpop.f32.mrf.mxu0
        %752 = vdwg.mxu0
        %s753 = scalar_lea.vmem [#allocation7], 64
        %v754 = vld [vmem:[%s753] sm:$0xff]
        %v755 = vld [vmem:[%s753 + $0x8] sm:$0xff]
        %v756 = vld [vmem:[%s753 + $0x10] sm:$0xff]
        %v757 = vld [vmem:[%s753 + $0x18] sm:$0xff]
        %s758 = scalar_lea.vmem [#allocation9], 2
        %v759 = vld [vmem:[%s758] sm:$0x1]
        %v761 = vlaneseq
        %v762 = vshrl.u32 %v761, 7
        %v763 = vsub.s32 0, %v762
        %v764 = vrot.slane %v759, %v763
        %v767 = vsel %vm604, %v750, 0
        %769 = vmatprep.subr.mxu0 0.0
        %770 = vmatpush1.msra.mxu0 0.0
        %771 = vmatprep.subr.mxu0 0.0
        %772 = vmatpush1.msra.mxu0 0.0
        %773 = vmatprep.subr.mxu0 0.0
        %774 = vmatpush1.msra.mxu0 0.0
        %775 = vmatprep.subr.mxu0 0.0
        %776 = vmatpush1.msra.mxu0 0.0
        %777 = vmatprep.subr.mxu0 0.0
        %778 = vmatpush1.msra.mxu0 0.0
        %779 = vmatprep.subr.mxu0 0.0
        %780 = vmatpush1.msra.mxu0 0.0
        %781 = vmatprep.subr.mxu0 0.0
        %782 = vmatpush1.msra.mxu0 0.0
        %783 = vmatprep.subr.mxu0 0.0
        %784 = vmatpush1.msra.mxu0 0.0
        %785 = vmatprep.subr.mxu0 0.0
        %786 = vmatpush1.msra.mxu0 0.0
        %787 = vmatprep.subr.mxu0 0.0
        %788 = vmatpush1.msra.mxu0 0.0
        %789 = vmatprep.subr.mxu0 0.0
        %790 = vmatpush1.msra.mxu0 0.0
        %791 = vmatprep.subr.mxu0 0.0
        %792 = vmatpush1.msra.mxu0 0.0
        %793 = vmatprep.subr.mxu0 0.0
        %794 = vmatpush1.msra.mxu0 %v757
        %795 = vmatprep.subr.mxu0 0.0
        %796 = vmatpush1.msra.mxu0 %v756
        %797 = vmatprep.subr.mxu0 0.0
        %798 = vmatpush1.msra.mxu0 %v755
        %799 = vmatprep.subr.mxu0 0.0
        %800 = vmatpush1.msra.mxu0 %v754
        %801 = vmatprep.subr.mxu0 0.0
        %802 = vmatpush2.msra.mxu0 0.0
        %803 = vmatprep.subr.mxu0 0.0
        %804 = vmatpush2.msra.mxu0 0.0
        %805 = vmatprep.subr.mxu0 0.0
        %806 = vmatpush2.msra.mxu0 0.0
        %807 = vmatprep.subr.mxu0 0.0
        %808 = vmatpush2.msra.mxu0 0.0
        %809 = vmatprep.subr.mxu0 0.0
        %810 = vmatpush2.msra.mxu0 0.0
        %811 = vmatprep.subr.mxu0 0.0
        %812 = vmatpush2.msra.mxu0 0.0
        %813 = vmatprep.subr.mxu0 0.0
        %814 = vmatpush2.msra.mxu0 0.0
        %815 = vmatprep.subr.mxu0 0.0
        %816 = vmatpush2.msra.mxu0 0.0
        %817 = vmatprep.subr.mxu0 0.0
        %818 = vmatpush2.msra.mxu0 0.0
        %819 = vmatprep.subr.mxu0 0.0
        %820 = vmatpush2.msra.mxu0 0.0
        %821 = vmatprep.subr.mxu0 0.0
        %822 = vmatpush2.msra.mxu0 0.0
        %823 = vmatprep.subr.mxu0 0.0
        %824 = vmatpush2.msra.mxu0 0.0
        %825 = vmatprep.subr.mxu0 0.0
        %826 = vmatpush2.msra.mxu0 0.0
        %827 = vmatprep.subr.mxu0 0.0
        %828 = vmatpush2.msra.mxu0 0.0
        %829 = vmatprep.subr.mxu0 0.0
        %830 = vmatpush2.msra.mxu0 0.0
        %831 = vmatprep.subr.mxu0 0.0
        %832 = vmatpush2.msra.mxu0 0.0
        %833 = vmatprep.mubr.f32.mxu0 0.0
        %834 = vmatmul.mubr.f32.gmra.mxu0 %v767
        %v835 = vpop.f32.mrf.mxu0
        %v836 = vadd.f32 %v764, %v835
        %v837 = vpop.f32.mrf.mxu0
        %838 = vdwg.mxu0
        %v839 = vmax.f32 %v836, 0.0
        %s840 = scalar_lea.vmem [#allocation7], 96
        %v841 = vld [vmem:[%s840] sm:$0xff]
        %v842 = vld [vmem:[%s840 + $0x8] sm:$0xff]
        %v843 = vld [vmem:[%s840 + $0x10] sm:$0xff]
        %v844 = vld [vmem:[%s840 + $0x18] sm:$0xff]
        %s845 = scalar_lea.vmem [#allocation9], 3
        %v846 = vld [vmem:[%s845] sm:$0x1]
        %v848 = vlaneseq
        %v849 = vshrl.u32 %v848, 7
        %v850 = vsub.s32 0, %v849
        %v851 = vrot.slane %v846, %v850
        %v854 = vsel %vm604, %v839, 0
        %856 = vmatprep.subr.mxu0 0.0
        %857 = vmatpush1.msra.mxu0 0.0
        %858 = vmatprep.subr.mxu0 0.0
        %859 = vmatpush1.msra.mxu0 0.0
        %860 = vmatprep.subr.mxu0 0.0
        %861 = vmatpush1.msra.mxu0 0.0
        %862 = vmatprep.subr.mxu0 0.0
        %863 = vmatpush1.msra.mxu0 0.0
        %864 = vmatprep.subr.mxu0 0.0
        %865 = vmatpush1.msra.mxu0 0.0
        %866 = vmatprep.subr.mxu0 0.0
        %867 = vmatpush1.msra.mxu0 0.0
        %868 = vmatprep.subr.mxu0 0.0
        %869 = vmatpush1.msra.mxu0 0.0
        %870 = vmatprep.subr.mxu0 0.0
        %871 = vmatpush1.msra.mxu0 0.0
        %872 = vmatprep.subr.mxu0 0.0
        %873 = vmatpush1.msra.mxu0 0.0
        %874 = vmatprep.subr.mxu0 0.0
        %875 = vmatpush1.msra.mxu0 0.0
        %876 = vmatprep.subr.mxu0 0.0
        %877 = vmatpush1.msra.mxu0 0.0
        %878 = vmatprep.subr.mxu0 0.0
        %879 = vmatpush1.msra.mxu0 0.0
        %880 = vmatprep.subr.mxu0 0.0
        %881 = vmatpush1.msra.mxu0 %v844
        %882 = vmatprep.subr.mxu0 0.0
        %883 = vmatpush1.msra.mxu0 %v843
        %884 = vmatprep.subr.mxu0 0.0
        %885 = vmatpush1.msra.mxu0 %v842
        %886 = vmatprep.subr.mxu0 0.0
        %887 = vmatpush1.msra.mxu0 %v841
        %888 = vmatprep.subr.mxu0 0.0
        %889 = vmatpush2.msra.mxu0 0.0
        %890 = vmatprep.subr.mxu0 0.0
        %891 = vmatpush2.msra.mxu0 0.0
        %892 = vmatprep.subr.mxu0 0.0
        %893 = vmatpush2.msra.mxu0 0.0
        %894 = vmatprep.subr.mxu0 0.0
        %895 = vmatpush2.msra.mxu0 0.0
        %896 = vmatprep.subr.mxu0 0.0
        %897 = vmatpush2.msra.mxu0 0.0
        %898 = vmatprep.subr.mxu0 0.0
        %899 = vmatpush2.msra.mxu0 0.0
        %900 = vmatprep.subr.mxu0 0.0
        %901 = vmatpush2.msra.mxu0 0.0
        %902 = vmatprep.subr.mxu0 0.0
        %903 = vmatpush2.msra.mxu0 0.0
        %904 = vmatprep.subr.mxu0 0.0
        %905 = vmatpush2.msra.mxu0 0.0
        %906 = vmatprep.subr.mxu0 0.0
        %907 = vmatpush2.msra.mxu0 0.0
        %908 = vmatprep.subr.mxu0 0.0
        %909 = vmatpush2.msra.mxu0 0.0
        %910 = vmatprep.subr.mxu0 0.0
        %911 = vmatpush2.msra.mxu0 0.0
        %912 = vmatprep.subr.mxu0 0.0
        %913 = vmatpush2.msra.mxu0 0.0
        %914 = vmatprep.subr.mxu0 0.0
        %915 = vmatpush2.msra.mxu0 0.0
        %916 = vmatprep.subr.mxu0 0.0
        %917 = vmatpush2.msra.mxu0 0.0
        %918 = vmatprep.subr.mxu0 0.0
        %919 = vmatpush2.msra.mxu0 0.0
        %920 = vmatprep.mubr.f32.mxu0 0.0
        %921 = vmatmul.mubr.f32.gmra.mxu0 %v854
        %v922 = vpop.f32.mrf.mxu0
        %v923 = vadd.f32 %v851, %v922
        %v924 = vpop.f32.mrf.mxu0
        %925 = vdwg.mxu0
        %v926 = vmax.f32 %v923, 0.0
        %v927 = vld [vmem:[%s5] sm:$0xff]
        %v928 = vld [vmem:[%s5 + $0x8] sm:$0xff]
        %v929 = vld [vmem:[%s5 + $0x10] sm:$0xff]
        %v930 = vld [vmem:[%s5 + $0x18] sm:$0xff]
        %v931 = vld [vmem:[%s6] sm:$0x1]
        %v933 = vlaneseq
        %v934 = vshrl.u32 %v933, 7
        %v935 = vsub.s32 0, %v934
        %v936 = vrot.slane %v931, %v935
        %v939 = vsel %vm604, %v926, 0
        %941 = vmatprep.subr.mxu0 0.0
        %942 = vmatpush1.msra.mxu0 0.0
        %943 = vmatprep.subr.mxu0 0.0
        %944 = vmatpush1.msra.mxu0 0.0
        %945 = vmatprep.subr.mxu0 0.0
        %946 = vmatpush1.msra.mxu0 0.0
        %947 = vmatprep.subr.mxu0 0.0
        %948 = vmatpush1.msra.mxu0 0.0
        %949 = vmatprep.subr.mxu0 0.0
        %950 = vmatpush1.msra.mxu0 0.0
        %951 = vmatprep.subr.mxu0 0.0
        %952 = vmatpush1.msra.mxu0 0.0
        %953 = vmatprep.subr.mxu0 0.0
        %954 = vmatpush1.msra.mxu0 0.0
        %955 = vmatprep.subr.mxu0 0.0
        %956 = vmatpush1.msra.mxu0 0.0
        %957 = vmatprep.subr.mxu0 0.0
        %958 = vmatpush1.msra.mxu0 0.0
        %959 = vmatprep.subr.mxu0 0.0
        %960 = vmatpush1.msra.mxu0 0.0
        %961 = vmatprep.subr.mxu0 0.0
        %962 = vmatpush1.msra.mxu0 0.0
        %963 = vmatprep.subr.mxu0 0.0
        %964 = vmatpush1.msra.mxu0 0.0
        %965 = vmatprep.subr.mxu0 0.0
        %966 = vmatpush1.msra.mxu0 %v930
        %967 = vmatprep.subr.mxu0 0.0
        %968 = vmatpush1.msra.mxu0 %v929
        %969 = vmatprep.subr.mxu0 0.0
        %970 = vmatpush1.msra.mxu0 %v928
        %971 = vmatprep.subr.mxu0 0.0
        %972 = vmatpush1.msra.mxu0 %v927
        %973 = vmatprep.subr.mxu0 0.0
        %974 = vmatpush2.msra.mxu0 0.0
        %975 = vmatprep.subr.mxu0 0.0
        %976 = vmatpush2.msra.mxu0 0.0
        %977 = vmatprep.subr.mxu0 0.0
        %978 = vmatpush2.msra.mxu0 0.0
        %979 = vmatprep.subr.mxu0 0.0
        %980 = vmatpush2.msra.mxu0 0.0
        %981 = vmatprep.subr.mxu0 0.0
        %982 = vmatpush2.msra.mxu0 0.0
        %983 = vmatprep.subr.mxu0 0.0
        %984 = vmatpush2.msra.mxu0 0.0
        %985 = vmatprep.subr.mxu0 0.0
        %986 = vmatpush2.msra.mxu0 0.0
        %987 = vmatprep.subr.mxu0 0.0
        %988 = vmatpush2.msra.mxu0 0.0
        %989 = vmatprep.subr.mxu0 0.0
        %990 = vmatpush2.msra.mxu0 0.0
        %991 = vmatprep.subr.mxu0 0.0
        %992 = vmatpush2.msra.mxu0 0.0
        %993 = vmatprep.subr.mxu0 0.0
        %994 = vmatpush2.msra.mxu0 0.0
        %995 = vmatprep.subr.mxu0 0.0
        %996 = vmatpush2.msra.mxu0 0.0
        %997 = vmatprep.subr.mxu0 0.0
        %998 = vmatpush2.msra.mxu0 0.0
        %999 = vmatprep.subr.mxu0 0.0
        %1000 = vmatpush2.msra.mxu0 0.0
        %1001 = vmatprep.subr.mxu0 0.0
        %1002 = vmatpush2.msra.mxu0 0.0
        %1003 = vmatprep.subr.mxu0 0.0
        %1004 = vmatpush2.msra.mxu0 0.0
        %1005 = vmatprep.mubr.f32.mxu0 0.0
        %1006 = vmatmul.mubr.f32.gmra.mxu0 %v939
        %v1007 = vpop.f32.mrf.mxu0
        %v1008 = vadd.f32 %v936, %v1007
        %v1009 = vpop.f32.mrf.mxu0
        %1010 = vdwg.mxu0
        %v1011 = vld [vmem:[#allocation10] sm:$0xff]
        %v1012 = vld [vmem:[#allocation10 + $0x8] sm:$0xff]
        %v1013 = vld [vmem:[%s8] sm:$0x1]
        %v1015 = vlaneseq
        %v1016 = vshrl.u32 %v1015, 7
        %v1017 = vsub.s32 0, %v1016
        %v1018 = vrot.slane %v1013, %v1017
        %v1021 = vsel %vm516, %v1008, 0
        %1023 = vmatprep.subr.mxu0 0.0
        %1024 = vmatpush1.msra.mxu0 0.0
        %1025 = vmatprep.subr.mxu0 0.0
        %1026 = vmatpush1.msra.mxu0 0.0
        %1027 = vmatprep.subr.mxu0 0.0
        %1028 = vmatpush1.msra.mxu0 0.0
        %1029 = vmatprep.subr.mxu0 0.0
        %1030 = vmatpush1.msra.mxu0 0.0
        %1031 = vmatprep.subr.mxu0 0.0
        %1032 = vmatpush1.msra.mxu0 0.0
        %1033 = vmatprep.subr.mxu0 0.0
        %1034 = vmatpush1.msra.mxu0 0.0
        %1035 = vmatprep.subr.mxu0 0.0
        %1036 = vmatpush1.msra.mxu0 0.0
        %1037 = vmatprep.subr.mxu0 0.0
        %1038 = vmatpush1.msra.mxu0 0.0
        %1039 = vmatprep.subr.mxu0 0.0
        %1040 = vmatpush1.msra.mxu0 0.0
        %1041 = vmatprep.subr.mxu0 0.0
        %1042 = vmatpush1.msra.mxu0 0.0
        %1043 = vmatprep.subr.mxu0 0.0
        %1044 = vmatpush1.msra.mxu0 0.0
        %1045 = vmatprep.subr.mxu0 0.0
        %1046 = vmatpush1.msra.mxu0 0.0
        %1047 = vmatprep.subr.mxu0 0.0
        %1048 = vmatpush1.msra.mxu0 0.0
        %1049 = vmatprep.subr.mxu0 0.0
        %1050 = vmatpush1.msra.mxu0 0.0
        %1051 = vmatprep.subr.mxu0 0.0
        %1052 = vmatpush1.msra.mxu0 %v1012
        %1053 = vmatprep.subr.mxu0 0.0
        %1054 = vmatpush1.msra.mxu0 %v1011
        %1055 = vmatprep.subr.mxu0 0.0
        %1056 = vmatpush2.msra.mxu0 0.0
        %1057 = vmatprep.subr.mxu0 0.0
        %1058 = vmatpush2.msra.mxu0 0.0
        %1059 = vmatprep.subr.mxu0 0.0
        %1060 = vmatpush2.msra.mxu0 0.0
        %1061 = vmatprep.subr.mxu0 0.0
        %1062 = vmatpush2.msra.mxu0 0.0
        %1063 = vmatprep.subr.mxu0 0.0
        %1064 = vmatpush2.msra.mxu0 0.0
        %1065 = vmatprep.subr.mxu0 0.0
        %1066 = vmatpush2.msra.mxu0 0.0
        %1067 = vmatprep.subr.mxu0 0.0
        %1068 = vmatpush2.msra.mxu0 0.0
        %1069 = vmatprep.subr.mxu0 0.0
        %1070 = vmatpush2.msra.mxu0 0.0
        %1071 = vmatprep.subr.mxu0 0.0
        %1072 = vmatpush2.msra.mxu0 0.0
        %1073 = vmatprep.subr.mxu0 0.0
        %1074 = vmatpush2.msra.mxu0 0.0
        %1075 = vmatprep.subr.mxu0 0.0
        %1076 = vmatpush2.msra.mxu0 0.0
        %1077 = vmatprep.subr.mxu0 0.0
        %1078 = vmatpush2.msra.mxu0 0.0
        %1079 = vmatprep.subr.mxu0 0.0
        %1080 = vmatpush2.msra.mxu0 0.0
        %1081 = vmatprep.subr.mxu0 0.0
        %1082 = vmatpush2.msra.mxu0 0.0
        %1083 = vmatprep.subr.mxu0 0.0
        %1084 = vmatpush2.msra.mxu0 0.0
        %1085 = vmatprep.subr.mxu0 0.0
        %1086 = vmatpush2.msra.mxu0 0.0
        %1087 = vmatprep.mubr.f32.mxu0 0.0
        %1088 = vmatmul.mubr.f32.gmra.mxu0 %v1021
        %v1089 = vpop.f32.mrf.mxu0
        %v1090 = vadd.f32 %v1018, %v1089
        %v1091 = vpop.f32.mrf.mxu0
        %1092 = vdwg.mxu0
        %v1093 = vxor.u32 %v1090, 2147483648
        %v1094 = vmul.f32 %v1093, 1.442695
        %v1095 = vpow.pop %v1094
        %v1096 = vadd.f32 %v1095, 1.0
        %v1097 = vrcp.pop %v1096
        %v1098 = vmul.f32 1.0, %v1097
        %1100 = vrot.lane.b32.xlu0 %v1098, 32
        %v1101 = vpop.permute.xlu0 %1100
        %v1103 = vsel %vm604, %v1008, %v1101
        %vm1104 = vcmask 392192
        %1105 = vst.msk [vmem:[%s412] sm:$0xff] %vm1104, %v1103
        %1106 = vmatprep.subr.mxu0 0.0
        %1107 = vmatpush1.xpose.msra.mxu0 0.0
        %1108 = vmatprep.subr.mxu0 0.0
        %1109 = vmatpush1.xpose.msra.mxu0 0.0
        %1110 = vmatprep.subr.mxu0 0.0
        %1111 = vmatpush1.xpose.msra.mxu0 0.0
        %1112 = vmatprep.subr.mxu0 0.0
        %1113 = vmatpush1.xpose.msra.mxu0 0.0
        %1114 = vmatprep.subr.mxu0 0.0
        %1115 = vmatpush1.xpose.msra.mxu0 0.0
        %1116 = vmatprep.subr.mxu0 0.0
        %1117 = vmatpush1.xpose.msra.mxu0 0.0
        %1118 = vmatprep.subr.mxu0 0.0
        %1119 = vmatpush1.xpose.msra.mxu0 0.0
        %1120 = vmatprep.subr.mxu0 0.0
        %1121 = vmatpush1.xpose.msra.mxu0 0.0
        %1122 = vmatprep.subr.mxu0 0.0
        %1123 = vmatpush1.xpose.msra.mxu0 0.0
        %1124 = vmatprep.subr.mxu0 0.0
        %1125 = vmatpush1.xpose.msra.mxu0 0.0
        %1126 = vmatprep.subr.mxu0 0.0
        %1127 = vmatpush1.xpose.msra.mxu0 0.0
        %1128 = vmatprep.subr.mxu0 0.0
        %1129 = vmatpush1.xpose.msra.mxu0 0.0
        %1130 = vmatprep.subr.mxu0 0.0
        %1131 = vmatpush1.xpose.msra.mxu0 0.0
        %1132 = vmatprep.subr.mxu0 0.0
        %1133 = vmatpush1.xpose.msra.mxu0 0.0
        %1134 = vmatprep.subr.mxu0 0.0
        %1135 = vmatpush1.xpose.msra.mxu0 0.0
        %1136 = vmatprep.subr.mxu0 0.0
        %1137 = vmatpush1.xpose.msra.mxu0 %v1021
        %1138 = vmatprep.subr.mxu0 0.0
        %1139 = vmatpush2.xpose.msra.mxu0 0.0
        %1140 = vmatprep.subr.mxu0 0.0
        %1141 = vmatpush2.xpose.msra.mxu0 0.0
        %1142 = vmatprep.subr.mxu0 0.0
        %1143 = vmatpush2.xpose.msra.mxu0 0.0
        %1144 = vmatprep.subr.mxu0 0.0
        %1145 = vmatpush2.xpose.msra.mxu0 0.0
        %1146 = vmatprep.subr.mxu0 0.0
        %1147 = vmatpush2.xpose.msra.mxu0 0.0
        %1148 = vmatprep.subr.mxu0 0.0
        %1149 = vmatpush2.xpose.msra.mxu0 0.0
        %1150 = vmatprep.subr.mxu0 0.0
        %1151 = vmatpush2.xpose.msra.mxu0 0.0
        %1152 = vmatprep.subr.mxu0 0.0
        %1153 = vmatpush2.xpose.msra.mxu0 0.0
        %1154 = vmatprep.subr.mxu0 0.0
        %1155 = vmatpush2.xpose.msra.mxu0 0.0
        %1156 = vmatprep.subr.mxu0 0.0
        %1157 = vmatpush2.xpose.msra.mxu0 0.0
        %1158 = vmatprep.subr.mxu0 0.0
        %1159 = vmatpush2.xpose.msra.mxu0 0.0
        %1160 = vmatprep.subr.mxu0 0.0
        %1161 = vmatpush2.xpose.msra.mxu0 0.0
        %1162 = vmatprep.subr.mxu0 0.0
        %1163 = vmatpush2.xpose.msra.mxu0 0.0
        %1164 = vmatprep.subr.mxu0 0.0
        %1165 = vmatpush2.xpose.msra.mxu0 0.0
        %1166 = vmatprep.subr.mxu0 0.0
        %1167 = vmatpush2.xpose.msra.mxu0 0.0
        %1168 = vmatprep.subr.mxu0 0.0
        %1169 = vmatpush2.xpose.msra.mxu0 0.0
        %1170 = vmatprep.mubr.f32.mxu0 0.0
        %1171 = vmatmul.mubr.f32.gmra.mxu0 %v1021
        %v1172 = vpop.f32.mrf.mxu0
        %v1173 = vadd.f32 0.0, %v1172
        %v1174 = vpop.f32.mrf.mxu0
        %1175 = vdwg.mxu0
        %v1176 = vxor.u32 %v1173, 2147483648
        %v1177 = vmul.f32 %v1176, 1.442695
        %v1178 = vpow.pop %v1177
        %v1179 = vadd.f32 %v1178, 1.0
        %v1180 = vrcp.pop %v1179
        %v1181 = vmul.f32 1.0, %v1180
        %1182 = vst.msk [vmem:[%s426] sm:$0xff] %vm433, %v1181
        %s1183 = sand.u32 %s222, 1
        %s1184 = scalar_lea.sflag [#allocation6], %s1183
        %s1185 = sand.u32 %s222, 1
        %s1186 = smul.addr %s1185, 8
        %s1187 = scalar_lea.vmem [#allocation12], %s1186
        %p1188 = scmp.lt.s32.totalorder %s36, 1
        %s1189 = scalar_select %p1188, %s36, 1
        %s1190 = smul.addr %s1189, 8
        %s1191 = scalar_lea.vmem %s10, %s1190
        // Predicated region
        $region69: #{tpu_custom_call.1} parent=51 // pred_check
          %p1192 = pneg %p232
        $region70: #{tpu_custom_call.1} parent=51 // pred_check_branch
          %1194 = sbr.rel (%p1192) target = $region72
        $region71: #{tpu_custom_call.1} parent=51 // pred_region
          %s1196 = ssub.s32 128, 128
          %1197 = vsyncadd %s1184, %s1196
          %s1198 = smul.addr %s36, 128
          %s1199 = scalar_lea.hbm %s9, %s1198
          %s1201 = sshll.u32 %s1187, 4
          %s1202 = int_to_ptr.vmem [resolvable:$true] %s1201
          %1204 = dma.vmem_to_hbm [thread:$0]  %s1202, 128, %s1199, %s1184
        $region72: #{tpu_custom_call.1} parent=51 // pred_fallthru
          _
        // Predicated region
        $region73: #{tpu_custom_call.1} parent=51 // pred_check
          %p1205 = pneg %p258
        $region74: #{tpu_custom_call.1} parent=51 // pred_check_branch
          %1207 = sbr.rel (%p1205) target = $region76
        $region75: #{tpu_custom_call.1} parent=51 // pred_region
          _
        $region76: #{tpu_custom_call.1} parent=51 // pred_fallthru
          _
      $region52: #{tpu_custom_call.1} parent=5 // pred_fallthru
        _
      %p1208 = scmp.le.s32.totalorder 2, %s31
      // Predicated region
      $region77: #{tpu_custom_call.1} parent=5 // pred_check
        %p1209 = pneg %p1208
      $region78: #{tpu_custom_call.1} parent=5 // pred_check_branch
        %1211 = sbr.rel (%p1209) target = $region80
      $region79: #{tpu_custom_call.1} parent=5 // pred_region
        %s1212 = ssub.s32 %s31, 2
        // Predicated region
        $region81: #{tpu_custom_call.1} parent=79 // pred_check
          %p1213 = pneg %p238
        $region82: #{tpu_custom_call.1} parent=79 // pred_check_branch
          %1215 = sbr.rel (%p1213) target = $region84
        $region83: #{tpu_custom_call.1} parent=79 // pred_region
          %s1216 = sand.u32 %s223, 1
          %s1217 = scalar_lea.sflag [#allocation6], %s1216
          %s1218 = sand.u32 %s223, 1
          %s1219 = smul.addr %s1218, 8
          %s1220 = scalar_lea.vmem [#allocation12], %s1219
          %1221 = dma.done %s1217, 128
        $region84: #{tpu_custom_call.1} parent=79 // pred_fallthru
          _
        // Predicated region
        $region85: #{tpu_custom_call.1} parent=79 // pred_check
          %p1222 = pneg %p264
        $region86: #{tpu_custom_call.1} parent=79 // pred_check_branch
          %1224 = sbr.rel (%p1222) target = $region88
        $region87: #{tpu_custom_call.1} parent=79 // pred_region
          %p1225 = scmp.lt.s32.totalorder %s37, 1
          %s1226 = scalar_select %p1225, %s37, 1
          %s1227 = smul.addr %s1226, 8
          %s1228 = scalar_lea.vmem %s10, %s1227
        $region88: #{tpu_custom_call.1} parent=79 // pred_fallthru
          _
      $region80: #{tpu_custom_call.1} parent=5 // pred_fallthru
        _
    $region6: #{tpu_custom_call.1} parent=1 // loop_footer
      %s35 = sadd.s32 1, %s31
    $region7: #{tpu_custom_call.1} parent=1 // loop_footer_branch
      %30 = sbr.rel target = $region3
    $region8: #{tpu_custom_call.1} parent=1 // loop_exit
      _
    %1229 = vsyncpa [#allocation5], 1
    %s1230 = scalar_lea.sflag [#allocation5], 1
    %1231 = vsyncpa %s1230, 1
    %1232 = vsyncpa [#allocation8], 1
    %1233 = vsyncpa [#allocation11], 1
    %1234 = vsyncpa [#allocation6], 1
    %s1235 = scalar_lea.sflag [#allocation6], 1
    %1236 = vsyncpa %s1235, 1

</llo_original>
